<compile_context>
chip_gen: v6e
topology: v6e:2x2x1
jax: 0.10.0
libtpu: 0.0.40
codegen_flags: <defaults>
</compile_context>

<pallas_src>
import functools
import math

import jax
import jax.numpy as jnp
from jax import lax
from jax.experimental import pallas as pl
from jax.experimental.pallas import tpu as pltpu


_NEG_INF = -0.7 * float(jnp.finfo(jnp.float32).max)   # finite "-inf" for masked scores


def _round_up(x, m):
    return ((x + m - 1) // m) * m


# ---------------------------------------------------------------------------
# Linear projection: y = x @ W + b   (W stored as (d_in, d_out))
# ---------------------------------------------------------------------------
def _linear_kernel(x_ref, w_ref, b_ref, o_ref, acc_ref):
    k = pl.program_id(2)

    @pl.when(k == 0)
    def _():
        acc_ref[...] = jnp.zeros(acc_ref.shape, dtype=jnp.float32)

    acc_ref[...] += jnp.dot(x_ref[...], w_ref[...],
                            preferred_element_type=jnp.float32)

    @pl.when(k == pl.num_programs(2) - 1)
    def _():
        o_ref[...] = (acc_ref[...] + b_ref[...].astype(jnp.float32)).astype(o_ref.dtype)


def _linear(x2d, w, b, *, block_rows=256, block_cols=512, block_k=512):
    """x2d: (n, d_in); w: (d_in, d_out) pre-transposed; b: (d_out,)."""
    n, d_in = x2d.shape
    d_out = w.shape[1]

    # Row tile: large by default; pad n (no divisibility assert).  Padded rows are zeros
    # and are sliced off after the call.
    tm = min(block_rows, _round_up(n, 8))
    n_pad = _round_up(n, tm)
    if n_pad != n:
        x2d = jnp.pad(x2d, ((0, n_pad - n), (0, 0)))

    # Weight tiles: stream d_in / d_out in tiles when they are large, otherwise use the
    # full (small) dimension — keeps weight VMEM bounded instead of holding W resident.
    tn = block_cols if (d_out % block_cols == 0) else d_out
    tk = block_k if (d_in % block_k == 0) else d_in

    grid = (n_pad // tm, d_out // tn, d_in // tk)
    bytes_per_el = jnp.dtype(x2d.dtype).itemsize

    out = pl.pallas_call(
        _linear_kernel,
        out_shape=jax.ShapeDtypeStruct((n_pad, d_out), x2d.dtype),
        grid_spec=pltpu.PrefetchScalarGridSpec(
            num_scalar_prefetch=0,
            grid=grid,
            in_specs=[
                pl.BlockSpec((tm, tk), lambda i, j, k: (i, k)),   # x tile
                pl.BlockSpec((tk, tn), lambda i, j, k: (k, j)),   # W tile
                pl.BlockSpec((1, tn), lambda i, j, k: (0, j)),    # bias tile
            ],
            out_specs=pl.BlockSpec((tm, tn), lambda i, j, k: (i, j)),
            scratch_shapes=[pltpu.VMEM((tm, tn), jnp.float32)],
        ),
        compiler_params=pltpu.CompilerParams(
            dimension_semantics=("parallel", "parallel", "arbitrary"),
            vmem_limit_bytes=48 * 1024 * 1024,
        ),
        cost_estimate=pl.CostEstimate(
            flops=2 * n_pad * d_out * d_in,
            transcendentals=0,
            bytes_accessed=(n_pad * d_in + d_in * d_out + n_pad * d_out + d_out)
            * bytes_per_el,
        ),
    )(x2d, w, b.reshape(1, d_out))

    if n_pad != n:
        out = out[:n]
    return out


# ---------------------------------------------------------------------------
# Flash-attention forward (no mask; dropout = identity at inference)
# ---------------------------------------------------------------------------
def _flash_attn_kernel(q_ref, k_ref, v_ref, o_ref, m_sc, l_sc, acc_sc,
                       *, sm_scale, block_k, kv_len, mask_kv):
    ki = pl.program_id(2)

    @pl.when(ki == 0)
    def _():
        m_sc[...] = jnp.full(m_sc.shape, -jnp.inf, dtype=jnp.float32)
        l_sc[...] = jnp.zeros(l_sc.shape, dtype=jnp.float32)
        acc_sc[...] = jnp.zeros(acc_sc.shape, dtype=jnp.float32)

    q = q_ref[0]    # (tq, d_k)
    k = k_ref[0]    # (tk, d_k)
    v = v_ref[0]    # (tk, d_k)

    # scores = q @ k^T / sqrt(d_k)   (f32 accumulation on the MXU)
    s = lax.dot_general(q, k, (((1,), (1,)), ((), ())),
                        preferred_element_type=jnp.float32) * sm_scale

    if mask_kv:  # static: only emitted when the KV length was padded
        col = ki * block_k + lax.broadcasted_iota(jnp.int32, s.shape, 1)
        s = jnp.where(col < kv_len, s, _NEG_INF)

    m_prev = m_sc[0]                                     # (tq, 1)
    m_new = jnp.maximum(m_prev, s.max(axis=-1, keepdims=True))
    alpha = jnp.exp(m_prev - m_new)
    p = jnp.exp(s - m_new)                               # (tq, tk)

    # TODO(synk): attention-weight dropout (training mode) would use
    # pltpu.prng_seed + pltpu.stateful_bernoulli here; identity at inference.
    l_sc[0] = alpha * l_sc[0] + p.sum(axis=-1, keepdims=True)
    acc_sc[0] = alpha * acc_sc[0] + jnp.dot(p.astype(v.dtype), v,
                                            preferred_element_type=jnp.float32)
    m_sc[0] = m_new

    @pl.when(ki == pl.num_programs(2) - 1)
    def _():
        # Exact divide keeps tight numerical agreement with the reference softmax;
        # pl.reciprocal(l, approx=True) trades ~1e-3 rel. error for a free EUP op.
        o_ref[0] = (acc_sc[0] / l_sc[0]).astype(o_ref.dtype)


def _attention(q, k, v, *, block_q=128, block_k=128):
    """q: (BH, Sq, d_k); k, v: (BH, Sk, d_k). Returns (BH, Sq, d_k)."""
    bh, sq, d_k = q.shape
    sk = k.shape[1]

    # Tile the sequence dims; pad to the tile size.  Padded q rows are sliced off after
    # the call; padded kv columns are masked inside the kernel so softmax stays exact.
    tq = min(block_q, _round_up(sq, 8))
    sq_pad = _round_up(sq, tq)
    tk = min(block_k, _round_up(sk, 8))
    sk_pad = _round_up(sk, tk)

    if sq_pad != sq:
        q = jnp.pad(q, ((0, 0), (0, sq_pad - sq), (0, 0)))
    if sk_pad != sk:
        k = jnp.pad(k, ((0, 0), (0, sk_pad - sk), (0, 0)))
        v = jnp.pad(v, ((0, 0), (0, sk_pad - sk), (0, 0)))

    sm_scale = 1.0 / math.sqrt(d_k)
    bytes_per_el = jnp.dtype(q.dtype).itemsize

    kernel = functools.partial(_flash_attn_kernel, sm_scale=sm_scale,
                               block_k=tk, kv_len=sk, mask_kv=(sk_pad != sk))

    out = pl.pallas_call(
        kernel,
        out_shape=jax.ShapeDtypeStruct((bh, sq_pad, d_k), q.dtype),
        grid_spec=pltpu.PrefetchScalarGridSpec(
            num_scalar_prefetch=0,
            grid=(bh, sq_pad // tq, sk_pad // tk),
            in_specs=[
                pl.BlockSpec((1, tq, d_k), lambda b, qi, ki: (b, qi, 0)),
                pl.BlockSpec((1, tk, d_k), lambda b, qi, ki: (b, ki, 0)),
                pl.BlockSpec((1, tk, d_k), lambda b, qi, ki: (b, ki, 0)),
            ],
            out_specs=pl.BlockSpec((1, tq, d_k), lambda b, qi, ki: (b, qi, 0)),
            scratch_shapes=[
                pltpu.VMEM((1, tq, 1), jnp.float32),    # running max m
                pltpu.VMEM((1, tq, 1), jnp.float32),    # running denom l
                pltpu.VMEM((1, tq, d_k), jnp.float32),  # output accumulator
            ],
        ),
        compiler_params=pltpu.CompilerParams(
            dimension_semantics=("parallel", "parallel", "arbitrary"),
            vmem_limit_bytes=48 * 1024 * 1024,
        ),
        cost_estimate=pl.CostEstimate(
            flops=4 * bh * sq_pad * sk_pad * d_k,
            transcendentals=bh * sq_pad * sk_pad,
            bytes_accessed=(2 * bh * sq_pad * d_k + 2 * bh * sk_pad * d_k)
            * bytes_per_el,
        ),
    )(q, k, v)

    if sq_pad != sq:
        out = out[:, :sq]
    return out


# ---------------------------------------------------------------------------
# Full MultiHeadedAttention forward
# ---------------------------------------------------------------------------
@functools.partial(jax.jit, static_argnames=("h",))
def multi_head_attention(query, key, value,
                         wq, bq, wk, bk, wv, bv, wo, bo, *, h):
    """query/key/value: (B, S, d_model). Weights pre-transposed to (d_in, d_out)."""
    # TODO(synk): optional attention mask (masked_fill with -inf) is not implemented;
    # the demo (and default forward) uses mask=None.
    b, sq, d_model = query.shape
    sk = key.shape[1]
    d_k = d_model // h

    q = _linear(query.reshape(b * sq, d_model), wq, bq)
    k = _linear(key.reshape(b * sk, d_model), wk, bk)
    v = _linear(value.reshape(b * sk, d_model), wv, bv)

    # (B*S, D) -> (B, h, S, d_k) -> (B*h, S, d_k)   (layout plumbing, done by XLA)
    q = q.reshape(b, sq, h, d_k).transpose(0, 2, 1, 3).reshape(b * h, sq, d_k)
    k = k.reshape(b, sk, h, d_k).transpose(0, 2, 1, 3).reshape(b * h, sk, d_k)
    v = v.reshape(b, sk, h, d_k).transpose(0, 2, 1, 3).reshape(b * h, sk, d_k)

    ctx = _attention(q, k, v)

    ctx = ctx.reshape(b, h, sq, d_k).transpose(0, 2, 1, 3).reshape(b * sq, h * d_k)
    out = _linear(ctx, wo, bo)
    return out.reshape(b, sq, d_model)


def init_params(key, d_model, dtype=jnp.float32):
    """nn.Linear-style init; weights stored PRE-TRANSPOSED as (d_in, d_out)."""
    ks = jax.random.split(key, 8)
    bound = 1.0 / math.sqrt(d_model)
    def w(k):  # (d_in, d_out)
        return jax.random.uniform(k, (d_model, d_model), dtype, -bound, bound)
    def bvec(k):
        return jax.random.uniform(k, (d_model,), dtype, -bound, bound)
    wq, bq = w(ks[0]), bvec(ks[1])
    wk, bk = w(ks[2]), bvec(ks[3])
    wv, bv = w(ks[4]), bvec(ks[5])
    wo, bo = w(ks[6]), bvec(ks[7])
    return wq, bq, wk, bk, wv, bv, wo, bo


def _reference_mha(query, key, value, wq, bq, wk, bk, wv, bv, wo, bo, h):
    b, sq, d_model = query.shape
    d_k = d_model // h
    q = query @ wq + bq
    k = key @ wk + bk
    v = value @ wv + bv
    q = q.reshape(b, sq, h, d_k).transpose(0, 2, 1, 3)
    k = k.reshape(b, -1, h, d_k).transpose(0, 2, 1, 3)
    v = v.reshape(b, -1, h, d_k).transpose(0, 2, 1, 3)
    s = jnp.einsum("bhqd,bhkd->bhqk", q, k) / math.sqrt(d_k)
    p = jax.nn.softmax(s, axis=-1)
    ctx = jnp.einsum("bhqk,bhkd->bhqd", p, v)
    ctx = ctx.transpose(0, 2, 1, 3).reshape(b, sq, d_model)
    return ctx @ wo + bo


if __name__ == "__main__":
    batch, seq, d_model, h = 2, 8, 32, 4

    key = jax.random.PRNGKey(0)
    kx, kp = jax.random.split(key)
    x = jax.random.normal(kx, (batch, seq, d_model), jnp.float32)
    params = init_params(kp, d_model)

    # Self-attention: query = key = value = x, mask=None, dropout in eval mode.
    y = multi_head_attention(x, x, x, *params, h=h)
    y = jax.block_until_ready(y)

    y_ref = _reference_mha(x, x, x, *params, h=h)
    assert y.shape == (batch, seq, d_model)
    assert jnp.allclose(y, y_ref, atol=1e-4, rtol=1e-4), float(jnp.max(jnp.abs(y - y_ref)))

    print("KERNEL_OK")
</pallas_src>

<mosaic_0001>
module attributes {stable_mosaic.version = 11 : i64} {
  func.func @_linear_kernel(%arg0: i32, %arg1: i32, %arg2: i32, %arg3: memref<16x32xf32, #tpu.memory_space<vmem>>, %arg4: memref<32x32xf32, #tpu.memory_space<vmem>>, %arg5: memref<1x32xf32, #tpu.memory_space<vmem>>, %arg6: memref<16x32xf32, #tpu.memory_space<vmem>>, %arg7: memref<16x32xf32, #tpu.memory_space<vmem>>) attributes {dimension_semantics = [#tpu.dimension_semantics<parallel>, #tpu.dimension_semantics<parallel>, #tpu.dimension_semantics<arbitrary>], iteration_bounds = array<i64: 1, 1, 1>, scalar_prefetch = 0 : i64, scratch_operands = 1 : i64, tpu.core_type = #tpu.core_type<tc>, window_params = [{transform_indices = @transform_0, window_bounds = array<i64: 16, 32>}, {transform_indices = @transform_1, window_bounds = array<i64: 32, 32>}, {transform_indices = @transform_2, window_bounds = array<i64: 1, 32>}, {transform_indices = @transform_3, window_bounds = array<i64: 16, 32>}]} {
    %c0_i32 = arith.constant 0 : i32
    %0 = arith.cmpi eq, %arg2, %c0_i32 : i32
    %1 = arith.extui %0 : i1 to i32
    %c0_i32_0 = arith.constant 0 : i32
    %2 = arith.cmpi ne, %1, %c0_i32_0 : i32
    scf.if %2 {
      %cst_10 = arith.constant 0.000000e+00 : f32
      %12 = vector.broadcast %cst_10 : f32 to vector<16x32xf32>
      %c0_11 = arith.constant 0 : index
      %c0_12 = arith.constant 0 : index
      %13 = vector.load %arg7[%c0_11, %c0_12] : memref<16x32xf32, #tpu.memory_space<vmem>>, vector<16x32xf32>
      tpu.vector_store %arg7[%c0_11, %c0_12], %12 {strides = array<i32>} : memref<16x32xf32, #tpu.memory_space<vmem>>, vector<16x32xf32>,
    } else {
    }
    %c0 = arith.constant 0 : index
    %c0_1 = arith.constant 0 : index
    %3 = vector.load %arg7[%c0, %c0_1] : memref<16x32xf32, #tpu.memory_space<vmem>>, vector<16x32xf32>
    %c0_2 = arith.constant 0 : index
    %c0_3 = arith.constant 0 : index
    %4 = vector.load %arg3[%c0_2, %c0_3] : memref<16x32xf32, #tpu.memory_space<vmem>>, vector<16x32xf32>
    %c0_4 = arith.constant 0 : index
    %c0_5 = arith.constant 0 : index
    %5 = vector.load %arg4[%c0_4, %c0_5] : memref<32x32xf32, #tpu.memory_space<vmem>>, vector<32x32xf32>
    %cst = arith.constant dense<0.000000e+00> : vector<16x32xf32>
    %6 = tpu.matmul %4, %5, %cst {dimension_numbers = #tpu.dot_dimension_numbers<[1], [0], [0], [1], [0, 0, 1, 1], [], []>} : vector<16x32xf32>, vector<32x32xf32>, vector<16x32xf32> -> vector<16x32xf32>
    %7 = arith.addf %3, %6 : vector<16x32xf32>
    %c0_6 = arith.constant 0 : index
    %c0_7 = arith.constant 0 : index
    %8 = vector.load %arg7[%c0_6, %c0_7] : memref<16x32xf32, #tpu.memory_space<vmem>>, vector<16x32xf32>
    tpu.vector_store %arg7[%c0_6, %c0_7], %7 {strides = array<i32>} : memref<16x32xf32, #tpu.memory_space<vmem>>, vector<16x32xf32>,
    %c0_i32_8 = arith.constant 0 : i32
    %9 = arith.cmpi eq, %arg2, %c0_i32_8 : i32
    %10 = arith.extui %9 : i1 to i32
    %c0_i32_9 = arith.constant 0 : i32
    %11 = arith.cmpi ne, %10, %c0_i32_9 : i32
    scf.if %11 {
      %c0_10 = arith.constant 0 : index
      %c0_11 = arith.constant 0 : index
      %12 = vector.load %arg7[%c0_10, %c0_11] : memref<16x32xf32, #tpu.memory_space<vmem>>, vector<16x32xf32>
      %c0_12 = arith.constant 0 : index
      %c0_13 = arith.constant 0 : index
      %13 = vector.load %arg5[%c0_12, %c0_13] : memref<1x32xf32, #tpu.memory_space<vmem>>, vector<1x32xf32>
      %14 = vector.broadcast %13 : vector<1x32xf32> to vector<16x32xf32>
      %15 = arith.addf %12, %14 : vector<16x32xf32>
      %c0_14 = arith.constant 0 : index
      %c0_15 = arith.constant 0 : index
      %16 = vector.load %arg6[%c0_14, %c0_15] : memref<16x32xf32, #tpu.memory_space<vmem>>, vector<16x32xf32>
      tpu.vector_store %arg6[%c0_14, %c0_15], %15 {strides = array<i32>} : memref<16x32xf32, #tpu.memory_space<vmem>>, vector<16x32xf32>,
    } else {
    }
    return
  }
  func.func @transform_0(%arg0: i32, %arg1: i32, %arg2: i32) -> (i32, i32) {
    %c0_i32 = arith.constant 0 : i32
    return %arg0, %arg2 : i32, i32
  }
  func.func @transform_1(%arg0: i32, %arg1: i32, %arg2: i32) -> (i32, i32) {
    %c0_i32 = arith.constant 0 : i32
    return %arg2, %arg1 : i32, i32
  }
  func.func @transform_2(%arg0: i32, %arg1: i32, %arg2: i32) -> (i32, i32) {
    %c0_i32 = arith.constant 0 : i32
    %c0_i32_0 = arith.constant 0 : i32
    return %c0_i32, %arg1 : i32, i32
  }
  func.func @transform_3(%arg0: i32, %arg1: i32, %arg2: i32) -> (i32, i32) {
    %c0_i32 = arith.constant 0 : i32
    return %arg0, %arg1 : i32, i32
  }
}

module attributes {stable_mosaic.version = 11 : i64} {
  func.func @_linear_kernel(%arg0: i32, %arg1: i32, %arg2: i32, %arg3: memref<16x32xf32, #tpu.memory_space<vmem>>, %arg4: memref<32x32xf32, #tpu.memory_space<vmem>>, %arg5: memref<1x32xf32, #tpu.memory_space<vmem>>, %arg6: memref<16x32xf32, #tpu.memory_space<vmem>>, %arg7: memref<16x32xf32, #tpu.memory_space<vmem>>) attributes {dimension_semantics = [#tpu.dimension_semantics<parallel>, #tpu.dimension_semantics<parallel>, #tpu.dimension_semantics<arbitrary>], iteration_bounds = array<i64: 1, 1, 1>, scalar_prefetch = 0 : i64, scratch_operands = 1 : i64, tpu.core_type = #tpu.core_type<tc>, window_params = [{transform_indices = @transform_0, window_bounds = array<i64: 16, 32>}, {transform_indices = @transform_1, window_bounds = array<i64: 32, 32>}, {transform_indices = @transform_2, window_bounds = array<i64: 1, 32>}, {transform_indices = @transform_3, window_bounds = array<i64: 16, 32>}]} {
    %c0_i32 = arith.constant 0 : i32
    %0 = arith.cmpi eq, %arg2, %c0_i32 : i32
    %1 = arith.extui %0 : i1 to i32
    %c0_i32_0 = arith.constant 0 : i32
    %2 = arith.cmpi ne, %1, %c0_i32_0 : i32
    scf.if %2 {
      %cst_10 = arith.constant 0.000000e+00 : f32
      %12 = vector.broadcast %cst_10 : f32 to vector<16x32xf32>
      %c0_11 = arith.constant 0 : index
      %c0_12 = arith.constant 0 : index
      %13 = vector.load %arg7[%c0_11, %c0_12] : memref<16x32xf32, #tpu.memory_space<vmem>>, vector<16x32xf32>
      tpu.vector_store %arg7[%c0_11, %c0_12], %12 {strides = array<i32>} : memref<16x32xf32, #tpu.memory_space<vmem>>, vector<16x32xf32>,
    } else {
    }
    %c0 = arith.constant 0 : index
    %c0_1 = arith.constant 0 : index
    %3 = vector.load %arg7[%c0, %c0_1] : memref<16x32xf32, #tpu.memory_space<vmem>>, vector<16x32xf32>
    %c0_2 = arith.constant 0 : index
    %c0_3 = arith.constant 0 : index
    %4 = vector.load %arg3[%c0_2, %c0_3] : memref<16x32xf32, #tpu.memory_space<vmem>>, vector<16x32xf32>
    %c0_4 = arith.constant 0 : index
    %c0_5 = arith.constant 0 : index
    %5 = vector.load %arg4[%c0_4, %c0_5] : memref<32x32xf32, #tpu.memory_space<vmem>>, vector<32x32xf32>
    %cst = arith.constant dense<0.000000e+00> : vector<16x32xf32>
    %6 = tpu.matmul %4, %5, %cst {dimension_numbers = #tpu.dot_dimension_numbers<[1], [0], [0], [1], [0, 0, 1, 1], [], []>} : vector<16x32xf32>, vector<32x32xf32>, vector<16x32xf32> -> vector<16x32xf32>
    %7 = arith.addf %3, %6 : vector<16x32xf32>
    %c0_6 = arith.constant 0 : index
    %c0_7 = arith.constant 0 : index
    %8 = vector.load %arg7[%c0_6, %c0_7] : memref<16x32xf32, #tpu.memory_space<vmem>>, vector<16x32xf32>
    tpu.vector_store %arg7[%c0_6, %c0_7], %7 {strides = array<i32>} : memref<16x32xf32, #tpu.memory_space<vmem>>, vector<16x32xf32>,
    %c0_i32_8 = arith.constant 0 : i32
    %9 = arith.cmpi eq, %arg2, %c0_i32_8 : i32
    %10 = arith.extui %9 : i1 to i32
    %c0_i32_9 = arith.constant 0 : i32
    %11 = arith.cmpi ne, %10, %c0_i32_9 : i32
    scf.if %11 {
      %c0_10 = arith.constant 0 : index
      %c0_11 = arith.constant 0 : index
      %12 = vector.load %arg7[%c0_10, %c0_11] : memref<16x32xf32, #tpu.memory_space<vmem>>, vector<16x32xf32>
      %c0_12 = arith.constant 0 : index
      %c0_13 = arith.constant 0 : index
      %13 = vector.load %arg5[%c0_12, %c0_13] : memref<1x32xf32, #tpu.memory_space<vmem>>, vector<1x32xf32>
      %14 = vector.broadcast %13 : vector<1x32xf32> to vector<16x32xf32>
      %15 = arith.addf %12, %14 : vector<16x32xf32>
      %c0_14 = arith.constant 0 : index
      %c0_15 = arith.constant 0 : index
      %16 = vector.load %arg6[%c0_14, %c0_15] : memref<16x32xf32, #tpu.memory_space<vmem>>, vector<16x32xf32>
      tpu.vector_store %arg6[%c0_14, %c0_15], %15 {strides = array<i32>} : memref<16x32xf32, #tpu.memory_space<vmem>>, vector<16x32xf32>,
    } else {
    }
    return
  }
  func.func @transform_0(%arg0: i32, %arg1: i32, %arg2: i32) -> (i32, i32) {
    %c0_i32 = arith.constant 0 : i32
    return %arg0, %arg2 : i32, i32
  }
  func.func @transform_1(%arg0: i32, %arg1: i32, %arg2: i32) -> (i32, i32) {
    %c0_i32 = arith.constant 0 : i32
    return %arg2, %arg1 : i32, i32
  }
  func.func @transform_2(%arg0: i32, %arg1: i32, %arg2: i32) -> (i32, i32) {
    %c0_i32 = arith.constant 0 : i32
    %c0_i32_0 = arith.constant 0 : i32
    return %c0_i32, %arg1 : i32, i32
  }
  func.func @transform_3(%arg0: i32, %arg1: i32, %arg2: i32) -> (i32, i32) {
    %c0_i32 = arith.constant 0 : i32
    return %arg0, %arg1 : i32, i32
  }
}

module attributes {stable_mosaic.version = 11 : i64} {
  func.func @_flash_attn_kernel(%arg0: i32, %arg1: i32, %arg2: i32, %arg3: memref<1x8x8xf32, #tpu.memory_space<vmem>>, %arg4: memref<1x8x8xf32, #tpu.memory_space<vmem>>, %arg5: memref<1x8x8xf32, #tpu.memory_space<vmem>>, %arg6: memref<1x8x8xf32, #tpu.memory_space<vmem>>, %arg7: memref<1x8x1xf32, #tpu.memory_space<vmem>>, %arg8: memref<1x8x1xf32, #tpu.memory_space<vmem>>, %arg9: memref<1x8x8xf32, #tpu.memory_space<vmem>>) attributes {dimension_semantics = [#tpu.dimension_semantics<parallel>, #tpu.dimension_semantics<parallel>, #tpu.dimension_semantics<arbitrary>], iteration_bounds = array<i64: 8, 1, 1>, scalar_prefetch = 0 : i64, scratch_operands = 3 : i64, tpu.core_type = #tpu.core_type<tc>, window_params = [{transform_indices = @transform_0, window_bounds = array<i64: 1, 8, 8>}, {transform_indices = @transform_1, window_bounds = array<i64: 1, 8, 8>}, {transform_indices = @transform_2, window_bounds = array<i64: 1, 8, 8>}, {transform_indices = @transform_3, window_bounds = array<i64: 1, 8, 8>}]} {
    %c0_i32 = arith.constant 0 : i32
    %0 = arith.cmpi eq, %arg2, %c0_i32 : i32
    %1 = arith.extui %0 : i1 to i32
    %c0_i32_0 = arith.constant 0 : i32
    %2 = arith.cmpi ne, %1, %c0_i32_0 : i32
    scf.if %2 {
      %cst_33 = arith.constant 0xFF800000 : f32
      %46 = vector.broadcast %cst_33 : f32 to vector<1x8x1xf32>
      %c0_34 = arith.constant 0 : index
      %c0_35 = arith.constant 0 : index
      %c0_36 = arith.constant 0 : index
      %47 = vector.load %arg7[%c0_34, %c0_35, %c0_36] : memref<1x8x1xf32, #tpu.memory_space<vmem>>, vector<1x8x1xf32>
      tpu.vector_store %arg7[%c0_34, %c0_35, %c0_36], %46 {strides = array<i32>} : memref<1x8x1xf32, #tpu.memory_space<vmem>>, vector<1x8x1xf32>,
      %cst_37 = arith.constant 0.000000e+00 : f32
      %48 = vector.broadcast %cst_37 : f32 to vector<1x8x1xf32>
      %c0_38 = arith.constant 0 : index
      %c0_39 = arith.constant 0 : index
      %c0_40 = arith.constant 0 : index
      %49 = vector.load %arg8[%c0_38, %c0_39, %c0_40] : memref<1x8x1xf32, #tpu.memory_space<vmem>>, vector<1x8x1xf32>
      tpu.vector_store %arg8[%c0_38, %c0_39, %c0_40], %48 {strides = array<i32>} : memref<1x8x1xf32, #tpu.memory_space<vmem>>, vector<1x8x1xf32>,
      %cst_41 = arith.constant 0.000000e+00 : f32
      %50 = vector.broadcast %cst_41 : f32 to vector<1x8x8xf32>
      %c0_42 = arith.constant 0 : index
      %c0_43 = arith.constant 0 : index
      %c0_44 = arith.constant 0 : index
      %51 = vector.load %arg9[%c0_42, %c0_43, %c0_44] : memref<1x8x8xf32, #tpu.memory_space<vmem>>, vector<1x8x8xf32>
      tpu.vector_store %arg9[%c0_42, %c0_43, %c0_44], %50 {strides = array<i32>} : memref<1x8x8xf32, #tpu.memory_space<vmem>>, vector<1x8x8xf32>,
    } else {
    }
    %c0 = arith.constant 0 : index
    %c0_1 = arith.constant 0 : index
    %c0_2 = arith.constant 0 : index
    %3 = vector.load %arg3[%c0, %c0_1, %c0_2] : memref<1x8x8xf32, #tpu.memory_space<vmem>>, vector<1x8x8xf32>
    %4 = vector.shape_cast %3 : vector<1x8x8xf32> to vector<8x8xf32>
    %c0_3 = arith.constant 0 : index
    %c0_4 = arith.constant 0 : index
    %c0_5 = arith.constant 0 : index
    %5 = vector.load %arg4[%c0_3, %c0_4, %c0_5] : memref<1x8x8xf32, #tpu.memory_space<vmem>>, vector<1x8x8xf32>
    %6 = vector.shape_cast %5 : vector<1x8x8xf32> to vector<8x8xf32>
    %c0_6 = arith.constant 0 : index
    %c0_7 = arith.constant 0 : index
    %c0_8 = arith.constant 0 : index
    %7 = vector.load %arg5[%c0_6, %c0_7, %c0_8] : memref<1x8x8xf32, #tpu.memory_space<vmem>>, vector<1x8x8xf32>
    %8 = vector.shape_cast %7 : vector<1x8x8xf32> to vector<8x8xf32>
    %cst = arith.constant dense<0.000000e+00> : vector<8x8xf32>
    %9 = tpu.matmul %4, %6, %cst {dimension_numbers = #tpu.dot_dimension_numbers<[1], [1], [0], [0], [0, 0, 1, 0], [], []>} : vector<8x8xf32>, vector<8x8xf32>, vector<8x8xf32> -> vector<8x8xf32>
    %cst_9 = arith.constant 0.353553385 : f32
    %10 = vector.broadcast %cst_9 : f32 to vector<8x8xf32>
    %11 = arith.mulf %9, %10 : vector<8x8xf32>
    %c0_10 = arith.constant 0 : index
    %c0_11 = arith.constant 0 : index
    %c0_12 = arith.constant 0 : index
    %12 = vector.load %arg7[%c0_10, %c0_11, %c0_12] : memref<1x8x1xf32, #tpu.memory_space<vmem>>, vector<1x8x1xf32>
    %13 = vector.shape_cast %12 : vector<1x8x1xf32> to vector<8x1xf32>
    %cst_13 = arith.constant dense<0xFF800000> : vector<8xf32>
    %14 = vector.multi_reduction <maximumf>, %11, %cst_13 [1] : vector<8x8xf32> to vector<8xf32>
    %15 = vector.shape_cast %14 : vector<8xf32> to vector<8x1xf32>
    %16 = arith.maximumf %13, %15 : vector<8x1xf32>
    %17 = arith.subf %13, %16 : vector<8x1xf32>
    %18 = math.exp %17 : vector<8x1xf32>
    %19 = vector.broadcast %16 : vector<8x1xf32> to vector<8x8xf32>
    %20 = arith.subf %11, %19 : vector<8x8xf32>
    %21 = math.exp %20 : vector<8x8xf32>
    %c0_14 = arith.constant 0 : index
    %c0_15 = arith.constant 0 : index
    %c0_16 = arith.constant 0 : index
    %22 = vector.load %arg8[%c0_14, %c0_15, %c0_16] : memref<1x8x1xf32, #tpu.memory_space<vmem>>, vector<1x8x1xf32>
    %23 = vector.shape_cast %22 : vector<1x8x1xf32> to vector<8x1xf32>
    %24 = arith.mulf %18, %23 : vector<8x1xf32>
    %cst_17 = arith.constant dense<0.000000e+00> : vector<8xf32>
    %25 = vector.multi_reduction <add>, %21, %cst_17 [1] : vector<8x8xf32> to vector<8xf32>
    %26 = vector.shape_cast %25 : vector<8xf32> to vector<8x1xf32>
    %27 = arith.addf %24, %26 : vector<8x1xf32>
    %c0_18 = arith.constant 0 : index
    %c0_19 = arith.constant 0 : index
    %c0_20 = arith.constant 0 : index
    %28 = vector.load %arg8[%c0_18, %c0_19, %c0_20] : memref<1x8x1xf32, #tpu.memory_space<vmem>>, vector<1x8x1xf32>
    %29 = vector.shape_cast %28 : vector<1x8x1xf32> to vector<8x1xf32>
    %30 = vector.shape_cast %27 : vector<8x1xf32> to vector<1x8x1xf32>
    tpu.vector_store %arg8[%c0_18, %c0_19, %c0_20], %30 {strides = array<i32>} : memref<1x8x1xf32, #tpu.memory_space<vmem>>, vector<1x8x1xf32>,
    %c0_21 = arith.constant 0 : index
    %c0_22 = arith.constant 0 : index
    %c0_23 = arith.constant 0 : index
    %31 = vector.load %arg9[%c0_21, %c0_22, %c0_23] : memref<1x8x8xf32, #tpu.memory_space<vmem>>, vector<1x8x8xf32>
    %32 = vector.shape_cast %31 : vector<1x8x8xf32> to vector<8x8xf32>
    %33 = vector.broadcast %18 : vector<8x1xf32> to vector<8x8xf32>
    %34 = arith.mulf %33, %32 : vector<8x8xf32>
    %cst_24 = arith.constant dense<0.000000e+00> : vector<8x8xf32>
    %35 = tpu.matmul %21, %8, %cst_24 {dimension_numbers = #tpu.dot_dimension_numbers<[1], [0], [0], [1], [0, 0, 1, 1], [], []>} : vector<8x8xf32>, vector<8x8xf32>, vector<8x8xf32> -> vector<8x8xf32>
    %36 = arith.addf %34, %35 : vector<8x8xf32>
    %c0_25 = arith.constant 0 : index
    %c0_26 = arith.constant 0 : index
    %c0_27 = arith.constant 0 : index
    %37 = vector.load %arg9[%c0_25, %c0_26, %c0_27] : memref<1x8x8xf32, #tpu.memory_space<vmem>>, vector<1x8x8xf32>
    %38 = vector.shape_cast %37 : vector<1x8x8xf32> to vector<8x8xf32>
    %39 = vector.shape_cast %36 : vector<8x8xf32> to vector<1x8x8xf32>
    tpu.vector_store %arg9[%c0_25, %c0_26, %c0_27], %39 {strides = array<i32>} : memref<1x8x8xf32, #tpu.memory_space<vmem>>, vector<1x8x8xf32>,
    %c0_28 = arith.constant 0 : index
    %c0_29 = arith.constant 0 : index
    %c0_30 = arith.constant 0 : index
    %40 = vector.load %arg7[%c0_28, %c0_29, %c0_30] : memref<1x8x1xf32, #tpu.memory_space<vmem>>, vector<1x8x1xf32>
    %41 = vector.shape_cast %40 : vector<1x8x1xf32> to vector<8x1xf32>
    %42 = vector.shape_cast %16 : vector<8x1xf32> to vector<1x8x1xf32>
    tpu.vector_store %arg7[%c0_28, %c0_29, %c0_30], %42 {strides = array<i32>} : memref<1x8x1xf32, #tpu.memory_space<vmem>>, vector<1x8x1xf32>,
    %c0_i32_31 = arith.constant 0 : i32
    %43 = arith.cmpi eq, %arg2, %c0_i32_31 : i32
    %44 = arith.extui %43 : i1 to i32
    %c0_i32_32 = arith.constant 0 : i32
    %45 = arith.cmpi ne, %44, %c0_i32_32 : i32
    scf.if %45 {
      %c0_33 = arith.constant 0 : index
      %c0_34 = arith.constant 0 : index
      %c0_35 = arith.constant 0 : index
      %46 = vector.load %arg9[%c0_33, %c0_34, %c0_35] : memref<1x8x8xf32, #tpu.memory_space<vmem>>, vector<1x8x8xf32>
      %47 = vector.shape_cast %46 : vector<1x8x8xf32> to vector<8x8xf32>
      %c0_36 = arith.constant 0 : index
      %c0_37 = arith.constant 0 : index
      %c0_38 = arith.constant 0 : index
      %48 = vector.load %arg8[%c0_36, %c0_37, %c0_38] : memref<1x8x1xf32, #tpu.memory_space<vmem>>, vector<1x8x1xf32>
      %49 = vector.shape_cast %48 : vector<1x8x1xf32> to vector<8x1xf32>
      %50 = vector.broadcast %49 : vector<8x1xf32> to vector<8x8xf32>
      %51 = arith.divf %47, %50 : vector<8x8xf32>
      %c0_39 = arith.constant 0 : index
      %c0_40 = arith.constant 0 : index
      %c0_41 = arith.constant 0 : index
      %52 = vector.load %arg6[%c0_39, %c0_40, %c0_41] : memref<1x8x8xf32, #tpu.memory_space<vmem>>, vector<1x8x8xf32>
      %53 = vector.shape_cast %52 : vector<1x8x8xf32> to vector<8x8xf32>
      %54 = vector.shape_cast %51 : vector<8x8xf32> to vector<1x8x8xf32>
      tpu.vector_store %arg6[%c0_39, %c0_40, %c0_41], %54 {strides = array<i32>} : memref<1x8x8xf32, #tpu.memory_space<vmem>>, vector<1x8x8xf32>,
    } else {
    }
    return
  }
  func.func @transform_0(%arg0: i32, %arg1: i32, %arg2: i32) -> (i32, i32, i32) {
    %c0_i32 = arith.constant 0 : i32
    %c0_i32_0 = arith.constant 0 : i32
    return %arg0, %arg1, %c0_i32 : i32, i32, i32
  }
  func.func @transform_1(%arg0: i32, %arg1: i32, %arg2: i32) -> (i32, i32, i32) {
    %c0_i32 = arith.constant 0 : i32
    %c0_i32_0 = arith.constant 0 : i32
    return %arg0, %arg2, %c0_i32 : i32, i32, i32
  }
  func.func @transform_2(%arg0: i32, %arg1: i32, %arg2: i32) -> (i32, i32, i32) {
    %c0_i32 = arith.constant 0 : i32
    %c0_i32_0 = arith.constant 0 : i32
    return %arg0, %arg2, %c0_i32 : i32, i32, i32
  }
  func.func @transform_3(%arg0: i32, %arg1: i32, %arg2: i32) -> (i32, i32, i32) {
    %c0_i32 = arith.constant 0 : i32
    %c0_i32_0 = arith.constant 0 : i32
    return %arg0, %arg1, %c0_i32 : i32, i32, i32
  }
}

module attributes {stable_mosaic.version = 11 : i64} {
  func.func @_linear_kernel(%arg0: i32, %arg1: i32, %arg2: i32, %arg3: memref<16x32xf32, #tpu.memory_space<vmem>>, %arg4: memref<32x32xf32, #tpu.memory_space<vmem>>, %arg5: memref<1x32xf32, #tpu.memory_space<vmem>>, %arg6: memref<16x32xf32, #tpu.memory_space<vmem>>, %arg7: memref<16x32xf32, #tpu.memory_space<vmem>>) attributes {dimension_semantics = [#tpu.dimension_semantics<parallel>, #tpu.dimension_semantics<parallel>, #tpu.dimension_semantics<arbitrary>], iteration_bounds = array<i64: 1, 1, 1>, scalar_prefetch = 0 : i64, scratch_operands = 1 : i64, tpu.core_type = #tpu.core_type<tc>, window_params = [{transform_indices = @transform_0, window_bounds = array<i64: 16, 32>}, {transform_indices = @transform_1, window_bounds = array<i64: 32, 32>}, {transform_indices = @transform_2, window_bounds = array<i64: 1, 32>}, {transform_indices = @transform_3, window_bounds = array<i64: 16, 32>}]} {
    %c0_i32 = arith.constant 0 : i32
    %0 = arith.cmpi eq, %arg2, %c0_i32 : i32
    %1 = arith.extui %0 : i1 to i32
    %c0_i32_0 = arith.constant 0 : i32
    %2 = arith.cmpi ne, %1, %c0_i32_0 : i32
    scf.if %2 {
      %cst_10 = arith.constant 0.000000e+00 : f32
      %12 = vector.broadcast %cst_10 : f32 to vector<16x32xf32>
      %c0_11 = arith.constant 0 : index
      %c0_12 = arith.constant 0 : index
      %13 = vector.load %arg7[%c0_11, %c0_12] : memref<16x32xf32, #tpu.memory_space<vmem>>, vector<16x32xf32>
      tpu.vector_store %arg7[%c0_11, %c0_12], %12 {strides = array<i32>} : memref<16x32xf32, #tpu.memory_space<vmem>>, vector<16x32xf32>,
    } else {
    }
    %c0 = arith.constant 0 : index
    %c0_1 = arith.constant 0 : index
    %3 = vector.load %arg7[%c0, %c0_1] : memref<16x32xf32, #tpu.memory_space<vmem>>, vector<16x32xf32>
    %c0_2 = arith.constant 0 : index
    %c0_3 = arith.constant 0 : index
    %4 = vector.load %arg3[%c0_2, %c0_3] : memref<16x32xf32, #tpu.memory_space<vmem>>, vector<16x32xf32>
    %c0_4 = arith.constant 0 : index
    %c0_5 = arith.constant 0 : index
    %5 = vector.load %arg4[%c0_4, %c0_5] : memref<32x32xf32, #tpu.memory_space<vmem>>, vector<32x32xf32>
    %cst = arith.constant dense<0.000000e+00> : vector<16x32xf32>
    %6 = tpu.matmul %4, %5, %cst {dimension_numbers = #tpu.dot_dimension_numbers<[1], [0], [0], [1], [0, 0, 1, 1], [], []>} : vector<16x32xf32>, vector<32x32xf32>, vector<16x32xf32> -> vector<16x32xf32>
    %7 = arith.addf %3, %6 : vector<16x32xf32>
    %c0_6 = arith.constant 0 : index
    %c0_7 = arith.constant 0 : index
    %8 = vector.load %arg7[%c0_6, %c0_7] : memref<16x32xf32, #tpu.memory_space<vmem>>, vector<16x32xf32>
    tpu.vector_store %arg7[%c0_6, %c0_7], %7 {strides = array<i32>} : memref<16x32xf32, #tpu.memory_space<vmem>>, vector<16x32xf32>,
    %c0_i32_8 = arith.constant 0 : i32
    %9 = arith.cmpi eq, %arg2, %c0_i32_8 : i32
    %10 = arith.extui %9 : i1 to i32
    %c0_i32_9 = arith.constant 0 : i32
    %11 = arith.cmpi ne, %10, %c0_i32_9 : i32
    scf.if %11 {
      %c0_10 = arith.constant 0 : index
      %c0_11 = arith.constant 0 : index
      %12 = vector.load %arg7[%c0_10, %c0_11] : memref<16x32xf32, #tpu.memory_space<vmem>>, vector<16x32xf32>
      %c0_12 = arith.constant 0 : index
      %c0_13 = arith.constant 0 : index
      %13 = vector.load %arg5[%c0_12, %c0_13] : memref<1x32xf32, #tpu.memory_space<vmem>>, vector<1x32xf32>
      %14 = vector.broadcast %13 : vector<1x32xf32> to vector<16x32xf32>
      %15 = arith.addf %12, %14 : vector<16x32xf32>
      %c0_14 = arith.constant 0 : index
      %c0_15 = arith.constant 0 : index
      %16 = vector.load %arg6[%c0_14, %c0_15] : memref<16x32xf32, #tpu.memory_space<vmem>>, vector<16x32xf32>
      tpu.vector_store %arg6[%c0_14, %c0_15], %15 {strides = array<i32>} : memref<16x32xf32, #tpu.memory_space<vmem>>, vector<16x32xf32>,
    } else {
    }
    return
  }
  func.func @transform_0(%arg0: i32, %arg1: i32, %arg2: i32) -> (i32, i32) {
    %c0_i32 = arith.constant 0 : i32
    return %arg0, %arg2 : i32, i32
  }
  func.func @transform_1(%arg0: i32, %arg1: i32, %arg2: i32) -> (i32, i32) {
    %c0_i32 = arith.constant 0 : i32
    return %arg2, %arg1 : i32, i32
  }
  func.func @transform_2(%arg0: i32, %arg1: i32, %arg2: i32) -> (i32, i32) {
    %c0_i32 = arith.constant 0 : i32
    %c0_i32_0 = arith.constant 0 : i32
    return %c0_i32, %arg1 : i32, i32
  }
  func.func @transform_3(%arg0: i32, %arg1: i32, %arg2: i32) -> (i32, i32) {
    %c0_i32 = arith.constant 0 : i32
    return %arg0, %arg1 : i32, i32
  }
}

</mosaic_0001>

<llo_original>
// kernel: multi_head_attention.6
$region0: #{multi_head_attention.6}
  #allocation0 [shape = 'u32[]', space=smem, size = 0x4, offset = 0x4, fixed_abs, tag = 'smem constant byte address 0x4 - core index']
  #allocation1 [shape = 'u32[144,128]{1,0:T(1,128)}', space=vmem, size = 0x12000, scoped, tag = 'internal scratch']
  #allocation2 [shape = 'f32[16,32]{1,0:T(8,128)}', space=vmem, size = 0x2000, scoped, tag = 'scratch operand']
  %s0 = inlined_call_operand.vmem [shape: f32[16,32], index: 0, kind: input, shape index: {}]
  %s1 = inlined_call_operand.vmem [shape: f32[32,32], index: 1, kind: input, shape index: {}]
  %s2 = inlined_call_operand.vmem [shape: f32[1,32], index: 2, kind: input, shape index: {}]
  %s3 = inlined_call_operand.vmem [shape: f32[16,32], index: 3, kind: output, shape index: {}]
  %s4 = sld [smem:[#allocation0]]
  $region30: #{multi_head_attention.6} parent=0
    _
  %s6 = ssub.s32 1, %s4
  %s7 = scalar_select 0, %s6, %s4
  // Predicated region
  $region2: #{multi_head_attention.6} parent=0 // pred_check
    _
  $region3: #{multi_head_attention.6} parent=0 // pred_check_branch
    %9 = sbr.rel (0) target = $region5
  $region4: #{multi_head_attention.6} parent=0 // pred_region
    _
  $region5: #{multi_head_attention.6} parent=0 // pred_fallthru
    _
  // Predicated region
  $region6: #{multi_head_attention.6} parent=0 // pred_check
    _
  $region7: #{multi_head_attention.6} parent=0 // pred_check_branch
    %11 = sbr.rel (0) target = $region9
  $region8: #{multi_head_attention.6} parent=0 // pred_region
    _
  $region9: #{multi_head_attention.6} parent=0 // pred_fallthru
    _
  // Predicated region
  $region10: #{multi_head_attention.6} parent=0 // pred_check
    _
  $region11: #{multi_head_attention.6} parent=0 // pred_check_branch
    %13 = sbr.rel (0) target = $region13
  $region12: #{multi_head_attention.6} parent=0 // pred_region
    _
  $region13: #{multi_head_attention.6} parent=0 // pred_fallthru
    _
  %p14 = scmp.eq.s32.totalorder 0, 0
  // Predicated region
  $region14: #{multi_head_attention.6} parent=0 // pred_check
    %p15 = pneg %p14
  $region15: #{multi_head_attention.6} parent=0 // pred_check_branch
    %17 = sbr.rel (%p15) target = $region17
  $region16: #{multi_head_attention.6} parent=0 // pred_region
    %vm18 = vcmask 261120
    %19 = vst.msk [vmem:[#allocation2] sm:$0xff] %vm18, 0.0
    %20 = vst.msk [vmem:[#allocation2 + $0x8] sm:$0xff] %vm18, 0.0
  $region17: #{multi_head_attention.6} parent=0 // pred_fallthru
    _
  %v21 = vld [vmem:[#allocation2] sm:$0xff]
  %v22 = vld [vmem:[#allocation2 + $0x8] sm:$0xff]
  %v23 = vld [vmem:[%s0] sm:$0xff]
  %v24 = vld [vmem:[%s0 + $0x8] sm:$0xff]
  %v25 = vld [vmem:[%s1] sm:$0xff]
  %v26 = vld [vmem:[%s1 + $0x8] sm:$0xff]
  %v27 = vld [vmem:[%s1 + $0x10] sm:$0xff]
  %v28 = vld [vmem:[%s1 + $0x18] sm:$0xff]
  %vm29 = vcmask 261120
  %v31 = vsel %vm29, %v23, 0
  %v34 = vsel %vm29, %v24, 0
  %36 = vmatprep.subr.mxu0 0.0
  %37 = vmatpush1.msra.mxu0 0.0
  %38 = vmatprep.subr.mxu0 0.0
  %39 = vmatpush1.msra.mxu0 0.0
  %40 = vmatprep.subr.mxu0 0.0
  %41 = vmatpush1.msra.mxu0 0.0
  %42 = vmatprep.subr.mxu0 0.0
  %43 = vmatpush1.msra.mxu0 0.0
  %44 = vmatprep.subr.mxu0 0.0
  %45 = vmatpush1.msra.mxu0 0.0
  %46 = vmatprep.subr.mxu0 0.0
  %47 = vmatpush1.msra.mxu0 0.0
  %48 = vmatprep.subr.mxu0 0.0
  %49 = vmatpush1.msra.mxu0 0.0
  %50 = vmatprep.subr.mxu0 0.0
  %51 = vmatpush1.msra.mxu0 0.0
  %52 = vmatprep.subr.mxu0 0.0
  %53 = vmatpush1.msra.mxu0 0.0
  %54 = vmatprep.subr.mxu0 0.0
  %55 = vmatpush1.msra.mxu0 0.0
  %56 = vmatprep.subr.mxu0 0.0
  %57 = vmatpush1.msra.mxu0 0.0
  %58 = vmatprep.subr.mxu0 0.0
  %59 = vmatpush1.msra.mxu0 0.0
  %60 = vmatprep.subr.mxu0 0.0
  %61 = vmatpush1.msra.mxu0 %v28
  %62 = vmatprep.subr.mxu0 0.0
  %63 = vmatpush1.msra.mxu0 %v27
  %64 = vmatprep.subr.mxu0 0.0
  %65 = vmatpush1.msra.mxu0 %v26
  %66 = vmatprep.subr.mxu0 0.0
  %67 = vmatpush1.msra.mxu0 %v25
  %68 = vmatprep.subr.mxu0 0.0
  %69 = vmatpush2.msra.mxu0 0.0
  %70 = vmatprep.subr.mxu0 0.0
  %71 = vmatpush2.msra.mxu0 0.0
  %72 = vmatprep.subr.mxu0 0.0
  %73 = vmatpush2.msra.mxu0 0.0
  %74 = vmatprep.subr.mxu0 0.0
  %75 = vmatpush2.msra.mxu0 0.0
  %76 = vmatprep.subr.mxu0 0.0
  %77 = vmatpush2.msra.mxu0 0.0
  %78 = vmatprep.subr.mxu0 0.0
  %79 = vmatpush2.msra.mxu0 0.0
  %80 = vmatprep.subr.mxu0 0.0
  %81 = vmatpush2.msra.mxu0 0.0
  %82 = vmatprep.subr.mxu0 0.0
  %83 = vmatpush2.msra.mxu0 0.0
  %84 = vmatprep.subr.mxu0 0.0
  %85 = vmatpush2.msra.mxu0 0.0
  %86 = vmatprep.subr.mxu0 0.0
  %87 = vmatpush2.msra.mxu0 0.0
  %88 = vmatprep.subr.mxu0 0.0
  %89 = vmatpush2.msra.mxu0 0.0
  %90 = vmatprep.subr.mxu0 0.0
  %91 = vmatpush2.msra.mxu0 0.0
  %92 = vmatprep.subr.mxu0 0.0
  %93 = vmatpush2.msra.mxu0 0.0
  %94 = vmatprep.subr.mxu0 0.0
  %95 = vmatpush2.msra.mxu0 0.0
  %96 = vmatprep.subr.mxu0 0.0
  %97 = vmatpush2.msra.mxu0 0.0
  %98 = vmatprep.subr.mxu0 0.0
  %99 = vmatpush2.msra.mxu0 0.0
  %100 = vmatprep.mubr.f32.mxu0 0.0
  %101 = vmatmul.mubr.f32.gmra.mxu0 %v31
  %v102 = vpop.f32.mrf.mxu0
  %v103 = vadd.f32 0.0, %v102
  %v104 = vpop.f32.mrf.mxu0
  %105 = vmatprep.mubr.f32.mxu0 0.0
  %106 = vmatmul.mubr.f32.gmra.mxu0 %v34
  %v107 = vpop.f32.mrf.mxu0
  %v108 = vadd.f32 0.0, %v107
  %v109 = vpop.f32.mrf.mxu0
  %110 = vdwg.mxu0
  %v111 = vadd.f32 %v21, %v103
  %v112 = vadd.f32 %v22, %v108
  %113 = vst.msk [vmem:[#allocation2] sm:$0xff] %vm29, %v111
  %114 = vst.msk [vmem:[#allocation2 + $0x8] sm:$0xff] %vm29, %v112
  // Predicated region
  $region18: #{multi_head_attention.6} parent=0 // pred_check
    %p115 = pneg %p14
  $region19: #{multi_head_attention.6} parent=0 // pred_check_branch
    %117 = sbr.rel (%p115) target = $region21
  $region20: #{multi_head_attention.6} parent=0 // pred_region
    %v118 = vld [vmem:[#allocation2] sm:$0xff]
    %v119 = vld [vmem:[#allocation2 + $0x8] sm:$0xff]
    %v120 = vld [vmem:[%s2] sm:$0x1]
    %v122 = vlaneseq
    %v123 = vshrl.u32 %v122, 7
    %v124 = vsub.s32 0, %v123
    %v125 = vrot.slane %v120, %v124
    %v127 = vadd.f32 %v118, %v125
    %v128 = vadd.f32 %v119, %v125
    %129 = vst.msk [vmem:[%s3] sm:$0xff] %vm29, %v127
    %130 = vst.msk [vmem:[%s3 + $0x8] sm:$0xff] %vm29, %v128
  $region21: #{multi_head_attention.6} parent=0 // pred_fallthru
    _
  // Predicated region
  $region22: #{multi_head_attention.6} parent=0 // pred_check
    _
  $region23: #{multi_head_attention.6} parent=0 // pred_check_branch
    %132 = sbr.rel (0) target = $region25
  $region24: #{multi_head_attention.6} parent=0 // pred_region
    _
  $region25: #{multi_head_attention.6} parent=0 // pred_fallthru
    _
  // Predicated region
  $region26: #{multi_head_attention.6} parent=0 // pred_check
    _
  $region27: #{multi_head_attention.6} parent=0 // pred_check_branch
    %134 = sbr.rel (0) target = $region29
  $region28: #{multi_head_attention.6} parent=0 // pred_region
    _
  $region29: #{multi_head_attention.6} parent=0 // pred_fallthru
    _

// kernel: multi_head_attention.5
$region0: #{multi_head_attention.5}
  #allocation0 [shape = 'u32[]', space=smem, size = 0x4, offset = 0x4, fixed_abs, tag = 'smem constant byte address 0x4 - core index']
  #allocation1 [shape = 'u32[144,128]{1,0:T(1,128)}', space=vmem, size = 0x12000, scoped, tag = 'internal scratch']
  #allocation2 [shape = 'f32[16,32]{1,0:T(8,128)}', space=vmem, size = 0x2000, scoped, tag = 'scratch operand']
  %s0 = inlined_call_operand.hbm [shape: f32[16,32], index: 0, kind: input, shape index: {}]
  %s1 = inlined_call_operand.hbm [shape: f32[32,32], index: 1, kind: input, shape index: {}]
  %s2 = inlined_call_operand.vmem [shape: f32[1,32], index: 2, kind: input, shape index: {}]
  %s3 = inlined_call_operand.vmem [shape: f32[16,32], index: 3, kind: output, shape index: {}]
  %s4 = sld [smem:[#allocation0]]
  $region38: #{multi_head_attention.5} parent=0
    _
  %s6 = ssub.s32 1, %s4
  %s7 = scalar_select 0, %s6, %s4
  $region1: #{multi_head_attention.5} parent=0
    #allocation3 [shape = 'u8[8192]{0}', space=vmem, size = 0x2000, scoped, tag = 'input window, operand 0, single buffered']
    #allocation4 [shape = 's32[1]{0}', space=sflag, size = 0x4, scoped, tag = 'scoped memory for multi_head_attention.5']
    #allocation5 [shape = 'u8[16384]{0}', space=vmem, size = 0x4000, scoped, tag = 'input window, operand 1, single buffered']
    #allocation6 [shape = 's32[1]{0}', space=sflag, size = 0x4, scoped, tag = 'scoped memory for multi_head_attention.5']
    %8 = vsyncpa [#allocation4], 0
    %9 = vsyncpa [#allocation6], 0
    // Predicated region
    $region2: #{multi_head_attention.5} parent=1 // pred_check
      _
    $region3: #{multi_head_attention.5} parent=1 // pred_check_branch
      %11 = sbr.rel (0) target = $region5
    $region4: #{multi_head_attention.5} parent=1 // pred_region
      %s13 = ssub.s32 256, 256
      %14 = vsyncadd [#allocation4], %s13
      %s15 = sshll.u32 [#allocation3], 4
      %s16 = int_to_ptr.vmem [resolvable:$true] %s15
      %21 = dma.hbm_to_vmem [thread:$0]  %s0, 256, %s16, [#allocation4], 128, 128, 8
    $region5: #{multi_head_attention.5} parent=1 // pred_fallthru
      _
    // Predicated region
    $region6: #{multi_head_attention.5} parent=1 // pred_check
      _
    $region7: #{multi_head_attention.5} parent=1 // pred_check_branch
      %23 = sbr.rel (0) target = $region9
    $region8: #{multi_head_attention.5} parent=1 // pred_region
      %s25 = ssub.s32 512, 512
      %26 = vsyncadd [#allocation6], %s25
      %s27 = sshll.u32 [#allocation5], 4
      %s28 = int_to_ptr.vmem [resolvable:$true] %s27
      %33 = dma.hbm_to_vmem [thread:$0]  %s1, 512, %s28, [#allocation6], 128, 128, 8
    $region9: #{multi_head_attention.5} parent=1 // pred_fallthru
      _
    // Predicated region
    $region10: #{multi_head_attention.5} parent=1 // pred_check
      _
    $region11: #{multi_head_attention.5} parent=1 // pred_check_branch
      %35 = sbr.rel (0) target = $region13
    $region12: #{multi_head_attention.5} parent=1 // pred_region
      _
    $region13: #{multi_head_attention.5} parent=1 // pred_fallthru
      _
    // Predicated region
    $region14: #{multi_head_attention.5} parent=1 // pred_check
      _
    $region15: #{multi_head_attention.5} parent=1 // pred_check_branch
      %37 = sbr.rel (0) target = $region17
    $region16: #{multi_head_attention.5} parent=1 // pred_region
      %38 = dma.done [#allocation4], 256
    $region17: #{multi_head_attention.5} parent=1 // pred_fallthru
      _
    // Predicated region
    $region18: #{multi_head_attention.5} parent=1 // pred_check
      _
    $region19: #{multi_head_attention.5} parent=1 // pred_check_branch
      %40 = sbr.rel (0) target = $region21
    $region20: #{multi_head_attention.5} parent=1 // pred_region
      %41 = dma.done [#allocation6], 512
    $region21: #{multi_head_attention.5} parent=1 // pred_fallthru
      _
    %p42 = scmp.eq.s32.totalorder 0, 0
    // Predicated region
    $region22: #{multi_head_attention.5} parent=1 // pred_check
      %p43 = pneg %p42
    $region23: #{multi_head_attention.5} parent=1 // pred_check_branch
      %45 = sbr.rel (%p43) target = $region25
    $region24: #{multi_head_attention.5} parent=1 // pred_region
      %vm46 = vcmask 261120
      %47 = vst.msk [vmem:[#allocation2] sm:$0xff] %vm46, 0.0
      %48 = vst.msk [vmem:[#allocation2 + $0x8] sm:$0xff] %vm46, 0.0
    $region25: #{multi_head_attention.5} parent=1 // pred_fallthru
      _
    %v49 = vld [vmem:[#allocation2] sm:$0xff]
    %v50 = vld [vmem:[#allocation2 + $0x8] sm:$0xff]
    %v51 = vld [vmem:[#allocation3] sm:$0xff]
    %v52 = vld [vmem:[#allocation3 + $0x8] sm:$0xff]
    %v53 = vld [vmem:[#allocation5] sm:$0xff]
    %v54 = vld [vmem:[#allocation5 + $0x8] sm:$0xff]
    %v55 = vld [vmem:[#allocation5 + $0x10] sm:$0xff]
    %v56 = vld [vmem:[#allocation5 + $0x18] sm:$0xff]
    %vm57 = vcmask 261120
    %v59 = vsel %vm57, %v51, 0
    %v62 = vsel %vm57, %v52, 0
    %64 = vmatprep.subr.mxu0 0.0
    %65 = vmatpush1.msra.mxu0 0.0
    %66 = vmatprep.subr.mxu0 0.0
    %67 = vmatpush1.msra.mxu0 0.0
    %68 = vmatprep.subr.mxu0 0.0
    %69 = vmatpush1.msra.mxu0 0.0
    %70 = vmatprep.subr.mxu0 0.0
    %71 = vmatpush1.msra.mxu0 0.0
    %72 = vmatprep.subr.mxu0 0.0
    %73 = vmatpush1.msra.mxu0 0.0
    %74 = vmatprep.subr.mxu0 0.0
    %75 = vmatpush1.msra.mxu0 0.0
    %76 = vmatprep.subr.mxu0 0.0
    %77 = vmatpush1.msra.mxu0 0.0
    %78 = vmatprep.subr.mxu0 0.0
    %79 = vmatpush1.msra.mxu0 0.0
    %80 = vmatprep.subr.mxu0 0.0
    %81 = vmatpush1.msra.mxu0 0.0
    %82 = vmatprep.subr.mxu0 0.0
    %83 = vmatpush1.msra.mxu0 0.0
    %84 = vmatprep.subr.mxu0 0.0
    %85 = vmatpush1.msra.mxu0 0.0
    %86 = vmatprep.subr.mxu0 0.0
    %87 = vmatpush1.msra.mxu0 0.0
    %88 = vmatprep.subr.mxu0 0.0
    %89 = vmatpush1.msra.mxu0 %v56
    %90 = vmatprep.subr.mxu0 0.0
    %91 = vmatpush1.msra.mxu0 %v55
    %92 = vmatprep.subr.mxu0 0.0
    %93 = vmatpush1.msra.mxu0 %v54
    %94 = vmatprep.subr.mxu0 0.0
    %95 = vmatpush1.msra.mxu0 %v53
    %96 = vmatprep.subr.mxu0 0.0
    %97 = vmatpush2.msra.mxu0 0.0
    %98 = vmatprep.subr.mxu0 0.0
    %99 = vmatpush2.msra.mxu0 0.0
    %100 = vmatprep.subr.mxu0 0.0
    %101 = vmatpush2.msra.mxu0 0.0
    %102 = vmatprep.subr.mxu0 0.0
    %103 = vmatpush2.msra.mxu0 0.0
    %104 = vmatprep.subr.mxu0 0.0
    %105 = vmatpush2.msra.mxu0 0.0
    %106 = vmatprep.subr.mxu0 0.0
    %107 = vmatpush2.msra.mxu0 0.0
    %108 = vmatprep.subr.mxu0 0.0
    %109 = vmatpush2.msra.mxu0 0.0
    %110 = vmatprep.subr.mxu0 0.0
    %111 = vmatpush2.msra.mxu0 0.0
    %112 = vmatprep.subr.mxu0 0.0
    %113 = vmatpush2.msra.mxu0 0.0
    %114 = vmatprep.subr.mxu0 0.0
    %115 = vmatpush2.msra.mxu0 0.0
    %116 = vmatprep.subr.mxu0 0.0
    %117 = vmatpush2.msra.mxu0 0.0
    %118 = vmatprep.subr.mxu0 0.0
    %119 = vmatpush2.msra.mxu0 0.0
    %120 = vmatprep.subr.mxu0 0.0
    %121 = vmatpush2.msra.mxu0 0.0
    %122 = vmatprep.subr.mxu0 0.0
    %123 = vmatpush2.msra.mxu0 0.0
    %124 = vmatprep.subr.mxu0 0.0
    %125 = vmatpush2.msra.mxu0 0.0
    %126 = vmatprep.subr.mxu0 0.0
    %127 = vmatpush2.msra.mxu0 0.0
    %128 = vmatprep.mubr.f32.mxu0 0.0
    %129 = vmatmul.mubr.f32.gmra.mxu0 %v59
    %v130 = vpop.f32.mrf.mxu0
    %v131 = vadd.f32 0.0, %v130
    %v132 = vpop.f32.mrf.mxu0
    %133 = vmatprep.mubr.f32.mxu0 0.0
    %134 = vmatmul.mubr.f32.gmra.mxu0 %v62
    %v135 = vpop.f32.mrf.mxu0
    %v136 = vadd.f32 0.0, %v135
    %v137 = vpop.f32.mrf.mxu0
    %138 = vdwg.mxu0
    %v139 = vadd.f32 %v49, %v131
    %v140 = vadd.f32 %v50, %v136
    %141 = vst.msk [vmem:[#allocation2] sm:$0xff] %vm57, %v139
    %142 = vst.msk [vmem:[#allocation2 + $0x8] sm:$0xff] %vm57, %v140
    // Predicated region
    $region26: #{multi_head_attention.5} parent=1 // pred_check
      %p143 = pneg %p42
    $region27: #{multi_head_attention.5} parent=1 // pred_check_branch
      %145 = sbr.rel (%p143) target = $region29
    $region28: #{multi_head_attention.5} parent=1 // pred_region
      %v146 = vld [vmem:[#allocation2] sm:$0xff]
      %v147 = vld [vmem:[#allocation2 + $0x8] sm:$0xff]
      %v148 = vld [vmem:[%s2] sm:$0x1]
      %v150 = vlaneseq
      %v151 = vshrl.u32 %v150, 7
      %v152 = vsub.s32 0, %v151
      %v153 = vrot.slane %v148, %v152
      %v155 = vadd.f32 %v146, %v153
      %v156 = vadd.f32 %v147, %v153
      %157 = vst.msk [vmem:[%s3] sm:$0xff] %vm57, %v155
      %158 = vst.msk [vmem:[%s3 + $0x8] sm:$0xff] %vm57, %v156
    $region29: #{multi_head_attention.5} parent=1 // pred_fallthru
      _
    // Predicated region
    $region30: #{multi_head_attention.5} parent=1 // pred_check
      _
    $region31: #{multi_head_attention.5} parent=1 // pred_check_branch
      %160 = sbr.rel (0) target = $region33
    $region32: #{multi_head_attention.5} parent=1 // pred_region
      _
    $region33: #{multi_head_attention.5} parent=1 // pred_fallthru
      _
    // Predicated region
    $region34: #{multi_head_attention.5} parent=1 // pred_check
      _
    $region35: #{multi_head_attention.5} parent=1 // pred_check_branch
      %162 = sbr.rel (0) target = $region37
    $region36: #{multi_head_attention.5} parent=1 // pred_region
      _
    $region37: #{multi_head_attention.5} parent=1 // pred_fallthru
      _
    %163 = vsyncpa [#allocation4], 1
    %164 = vsyncpa [#allocation6], 1

// kernel: multi_head_attention.9
$region0: #{multi_head_attention.9}
  #allocation0 [shape = 'u32[]', space=smem, size = 0x4, offset = 0x4, fixed_abs, tag = 'smem constant byte address 0x4 - core index']
  #allocation1 [shape = 'u32[144,128]{1,0:T(1,128)}', space=vmem, size = 0x12000, scoped, tag = 'internal scratch']
  #allocation2 [shape = 'f32[16,32]{1,0:T(8,128)}', space=vmem, size = 0x2000, scoped, tag = 'scratch operand']
  %s0 = inlined_call_operand.vmem [shape: f32[16,32], index: 0, kind: input, shape index: {}]
  %s1 = inlined_call_operand.vmem [shape: f32[32,32], index: 1, kind: input, shape index: {}]
  %s2 = inlined_call_operand.vmem [shape: f32[1,32], index: 2, kind: input, shape index: {}]
  %s3 = inlined_call_operand.hbm [shape: f32[16,32], index: 3, kind: output, shape index: {}]
  %s4 = sld [smem:[#allocation0]]
  $region30: #{multi_head_attention.9} parent=0
    _
  %s6 = ssub.s32 1, %s4
  %s7 = scalar_select 0, %s6, %s4
  $region1: #{multi_head_attention.9} parent=0
    #allocation3 [shape = 'u8[8192]{0}', space=vmem, size = 0x2000, scoped, tag = 'output window, operand 0, single buffered']
    #allocation4 [shape = 's32[1]{0}', space=sflag, size = 0x4, scoped, tag = 'scoped memory for multi_head_attention.9']
    %8 = vsyncpa [#allocation4], 0
    // Predicated region
    $region2: #{multi_head_attention.9} parent=1 // pred_check
      _
    $region3: #{multi_head_attention.9} parent=1 // pred_check_branch
      %10 = sbr.rel (0) target = $region5
    $region4: #{multi_head_attention.9} parent=1 // pred_region
      _
    $region5: #{multi_head_attention.9} parent=1 // pred_fallthru
      _
    // Predicated region
    $region6: #{multi_head_attention.9} parent=1 // pred_check
      _
    $region7: #{multi_head_attention.9} parent=1 // pred_check_branch
      %12 = sbr.rel (0) target = $region9
    $region8: #{multi_head_attention.9} parent=1 // pred_region
      _
    $region9: #{multi_head_attention.9} parent=1 // pred_fallthru
      _
    // Predicated region
    $region10: #{multi_head_attention.9} parent=1 // pred_check
      _
    $region11: #{multi_head_attention.9} parent=1 // pred_check_branch
      %14 = sbr.rel (0) target = $region13
    $region12: #{multi_head_attention.9} parent=1 // pred_region
      _
    $region13: #{multi_head_attention.9} parent=1 // pred_fallthru
      _
    %p15 = scmp.eq.s32.totalorder 0, 0
    // Predicated region
    $region14: #{multi_head_attention.9} parent=1 // pred_check
      %p16 = pneg %p15
    $region15: #{multi_head_attention.9} parent=1 // pred_check_branch
      %18 = sbr.rel (%p16) target = $region17
    $region16: #{multi_head_attention.9} parent=1 // pred_region
      %vm19 = vcmask 261120
      %20 = vst.msk [vmem:[#allocation2] sm:$0xff] %vm19, 0.0
      %21 = vst.msk [vmem:[#allocation2 + $0x8] sm:$0xff] %vm19, 0.0
    $region17: #{multi_head_attention.9} parent=1 // pred_fallthru
      _
    %v22 = vld [vmem:[#allocation2] sm:$0xff]
    %v23 = vld [vmem:[#allocation2 + $0x8] sm:$0xff]
    %v24 = vld [vmem:[%s0] sm:$0xff]
    %v25 = vld [vmem:[%s0 + $0x8] sm:$0xff]
    %v26 = vld [vmem:[%s1] sm:$0xff]
    %v27 = vld [vmem:[%s1 + $0x8] sm:$0xff]
    %v28 = vld [vmem:[%s1 + $0x10] sm:$0xff]
    %v29 = vld [vmem:[%s1 + $0x18] sm:$0xff]
    %vm30 = vcmask 261120
    %v32 = vsel %vm30, %v24, 0
    %v35 = vsel %vm30, %v25, 0
    %37 = vmatprep.subr.mxu0 0.0
    %38 = vmatpush1.msra.mxu0 0.0
    %39 = vmatprep.subr.mxu0 0.0
    %40 = vmatpush1.msra.mxu0 0.0
    %41 = vmatprep.subr.mxu0 0.0
    %42 = vmatpush1.msra.mxu0 0.0
    %43 = vmatprep.subr.mxu0 0.0
    %44 = vmatpush1.msra.mxu0 0.0
    %45 = vmatprep.subr.mxu0 0.0
    %46 = vmatpush1.msra.mxu0 0.0
    %47 = vmatprep.subr.mxu0 0.0
    %48 = vmatpush1.msra.mxu0 0.0
    %49 = vmatprep.subr.mxu0 0.0
    %50 = vmatpush1.msra.mxu0 0.0
    %51 = vmatprep.subr.mxu0 0.0
    %52 = vmatpush1.msra.mxu0 0.0
    %53 = vmatprep.subr.mxu0 0.0
    %54 = vmatpush1.msra.mxu0 0.0
    %55 = vmatprep.subr.mxu0 0.0
    %56 = vmatpush1.msra.mxu0 0.0
    %57 = vmatprep.subr.mxu0 0.0
    %58 = vmatpush1.msra.mxu0 0.0
    %59 = vmatprep.subr.mxu0 0.0
    %60 = vmatpush1.msra.mxu0 0.0
    %61 = vmatprep.subr.mxu0 0.0
    %62 = vmatpush1.msra.mxu0 %v29
    %63 = vmatprep.subr.mxu0 0.0
    %64 = vmatpush1.msra.mxu0 %v28
    %65 = vmatprep.subr.mxu0 0.0
    %66 = vmatpush1.msra.mxu0 %v27
    %67 = vmatprep.subr.mxu0 0.0
    %68 = vmatpush1.msra.mxu0 %v26
    %69 = vmatprep.subr.mxu0 0.0
    %70 = vmatpush2.msra.mxu0 0.0
    %71 = vmatprep.subr.mxu0 0.0
    %72 = vmatpush2.msra.mxu0 0.0
    %73 = vmatprep.subr.mxu0 0.0
    %74 = vmatpush2.msra.mxu0 0.0
    %75 = vmatprep.subr.mxu0 0.0
    %76 = vmatpush2.msra.mxu0 0.0
    %77 = vmatprep.subr.mxu0 0.0
    %78 = vmatpush2.msra.mxu0 0.0
    %79 = vmatprep.subr.mxu0 0.0
    %80 = vmatpush2.msra.mxu0 0.0
    %81 = vmatprep.subr.mxu0 0.0
    %82 = vmatpush2.msra.mxu0 0.0
    %83 = vmatprep.subr.mxu0 0.0
    %84 = vmatpush2.msra.mxu0 0.0
    %85 = vmatprep.subr.mxu0 0.0
    %86 = vmatpush2.msra.mxu0 0.0
    %87 = vmatprep.subr.mxu0 0.0
    %88 = vmatpush2.msra.mxu0 0.0
    %89 = vmatprep.subr.mxu0 0.0
    %90 = vmatpush2.msra.mxu0 0.0
    %91 = vmatprep.subr.mxu0 0.0
    %92 = vmatpush2.msra.mxu0 0.0
    %93 = vmatprep.subr.mxu0 0.0
    %94 = vmatpush2.msra.mxu0 0.0
    %95 = vmatprep.subr.mxu0 0.0
    %96 = vmatpush2.msra.mxu0 0.0
    %97 = vmatprep.subr.mxu0 0.0
    %98 = vmatpush2.msra.mxu0 0.0
    %99 = vmatprep.subr.mxu0 0.0
    %100 = vmatpush2.msra.mxu0 0.0
    %101 = vmatprep.mubr.f32.mxu0 0.0
    %102 = vmatmul.mubr.f32.gmra.mxu0 %v32
    %v103 = vpop.f32.mrf.mxu0
    %v104 = vadd.f32 0.0, %v103
    %v105 = vpop.f32.mrf.mxu0
    %106 = vmatprep.mubr.f32.mxu0 0.0
    %107 = vmatmul.mubr.f32.gmra.mxu0 %v35
    %v108 = vpop.f32.mrf.mxu0
    %v109 = vadd.f32 0.0, %v108
    %v110 = vpop.f32.mrf.mxu0
    %111 = vdwg.mxu0
    %v112 = vadd.f32 %v22, %v104
    %v113 = vadd.f32 %v23, %v109
    %114 = vst.msk [vmem:[#allocation2] sm:$0xff] %vm30, %v112
    %115 = vst.msk [vmem:[#allocation2 + $0x8] sm:$0xff] %vm30, %v113
    // Predicated region
    $region18: #{multi_head_attention.9} parent=1 // pred_check
      %p116 = pneg %p15
    $region19: #{multi_head_attention.9} parent=1 // pred_check_branch
      %118 = sbr.rel (%p116) target = $region21
    $region20: #{multi_head_attention.9} parent=1 // pred_region
      %v119 = vld [vmem:[#allocation2] sm:$0xff]
      %v120 = vld [vmem:[#allocation2 + $0x8] sm:$0xff]
      %v121 = vld [vmem:[%s2] sm:$0x1]
      %v123 = vlaneseq
      %v124 = vshrl.u32 %v123, 7
      %v125 = vsub.s32 0, %v124
      %v126 = vrot.slane %v121, %v125
      %v128 = vadd.f32 %v119, %v126
      %v129 = vadd.f32 %v120, %v126
      %130 = vst.msk [vmem:[#allocation3] sm:$0xff] %vm30, %v128
      %131 = vst.msk [vmem:[#allocation3 + $0x8] sm:$0xff] %vm30, %v129
    $region21: #{multi_head_attention.9} parent=1 // pred_fallthru
      _
    // Predicated region
    $region22: #{multi_head_attention.9} parent=1 // pred_check
      _
    $region23: #{multi_head_attention.9} parent=1 // pred_check_branch
      %133 = sbr.rel (0) target = $region25
    $region24: #{multi_head_attention.9} parent=1 // pred_region
      %s135 = ssub.s32 256, 256
      %136 = vsyncadd [#allocation4], %s135
      %s137 = sshll.u32 [#allocation3], 4
      %s138 = int_to_ptr.vmem [resolvable:$true] %s137
      %143 = dma.vmem_to_hbm [thread:$0]  %s138, 256, %s3, [#allocation4], 128, 128, 8
    $region25: #{multi_head_attention.9} parent=1 // pred_fallthru
      _
    // Predicated region
    $region26: #{multi_head_attention.9} parent=1 // pred_check
      _
    $region27: #{multi_head_attention.9} parent=1 // pred_check_branch
      %145 = sbr.rel (0) target = $region29
    $region28: #{multi_head_attention.9} parent=1 // pred_region
      %146 = dma.done [#allocation4], 256
    $region29: #{multi_head_attention.9} parent=1 // pred_fallthru
      _
    %147 = vsyncpa [#allocation4], 1

// kernel: multi_head_attention.8
$region0: #{multi_head_attention.8}
  #allocation0 [shape = 'u32[]', space=smem, size = 0x4, offset = 0x4, fixed_abs, tag = 'smem constant byte address 0x4 - core index']
  #allocation1 [shape = 'u32[144,128]{1,0:T(1,128)}', space=vmem, size = 0x12000, scoped, tag = 'internal scratch']
  #allocation2 [shape = 'f32[1,8,1]{2,1,0:T(8,128)}', space=vmem, size = 0x1000, scoped, tag = 'scratch operand']
  #allocation3 [shape = 'f32[1,8,1]{2,1,0:T(8,128)}', space=vmem, size = 0x1000, scoped, tag = 'scratch operand']
  #allocation4 [shape = 'f32[1,8,8]{2,1,0:T(8,128)}', space=vmem, size = 0x1000, scoped, tag = 'scratch operand']
  %s0 = inlined_call_operand.vmem [shape: f32[8,8,8], index: 0, kind: input, shape index: {}]
  %s1 = inlined_call_operand.vmem [shape: f32[8,8,8], index: 1, kind: input, shape index: {}]
  %s2 = inlined_call_operand.vmem [shape: f32[8,8,8], index: 2, kind: input, shape index: {}]
  %s3 = inlined_call_operand.vmem [shape: f32[8,8,8], index: 3, kind: output, shape index: {}]
  %s4 = sld [smem:[#allocation0]]
  $region53: #{multi_head_attention.8} parent=0
    _
  %s6 = ssub.s32 1, %s4
  %s7 = scalar_select 0, %s6, %s4
  loop: start=0, step=1, limit=10
  $region2: #{multi_head_attention.8} parent=0 // loop_pre_header
    _
  $region3: #{multi_head_attention.8} parent=0 // loop_header
    %s9 = sphi 0, %s13
    %p10 = scmp.ge.s32.totalorder %s9, 10
    %s16 = sphi 0, %s35
    %s17 = sphi 0, %s31
    %s18 = sphi 0, %s27
    %s19 = sphi 0, %s16
    %s20 = sphi 0, %s17
    %s21 = sphi 0, %s18
    %s22 = sphi 0, %s19
    %s23 = sphi 0, %s20
    %s24 = sphi 0, %s21
    %s40 = sphi 0, %s42
    %s43 = sphi 0, %s40
    %s44 = sphi 0, %s43
    %s60 = sphi 0, %s44
    %s68 = sphi 0, %s70
    %s71 = sphi 0, %s68
    %s72 = sphi 0, %s71
    %s88 = sphi 0, %s72
    %s96 = sphi 0, %s98
    %s99 = sphi 0, %s96
    %s100 = sphi 0, %s99
    %s116 = sphi 0, %s100
    %s124 = sphi 0, %s126
    %s127 = sphi 0, %s124
    %s128 = sphi 0, %s127
    %s144 = sphi 0, %s128
  $region4: #{multi_head_attention.8} parent=0 // loop_header_branch
    %12 = sbr.rel (%p10) target = $region8
  $region5: #{multi_head_attention.8} parent=0 // loop_body
    %s14 = ssub.s32 %s9, 1
    %s15 = ssub.s32 %s9, 2
    %s25 = sadd.s32 1, %s18
    %p26 = scmp.ge.s32.totalorder %s25, 1
    %s27 = scalar_select %p26, 0, %s25
    %s28 = sadd.s32 1, %s17
    %s29 = scalar_select %p26, %s28, %s17
    %p30 = scmp.ge.s32.totalorder %s29, 1
    %s31 = scalar_select %p30, 0, %s29
    %s32 = sadd.s32 1, %s16
    %s33 = scalar_select %p30, %s32, %s16
    %p34 = scmp.ge.s32.totalorder %s33, 8
    %s35 = scalar_select %p34, 0, %s33
    %s36 = ssub.s32 %s16, %s35
    %s37 = ssub.s32 %s17, %s31
    %s38 = sor.u32 %s36, %s37
    %p39 = scmp.eq.s32.totalorder %s38, 0
    %s41 = sadd.s32 %s40, 1
    %s42 = scalar_select %p39, %s40, %s41
    %p45 = pneg %p39
    %p46 = scmp.eq.s32.totalorder %s9, 7
    %p47 = por %p45, %p46
    %p48 = scmp.ne.s32.totalorder %s40, %s43
    %p49 = scmp.eq.s32.totalorder %s9, 0
    %p50 = por %p48, %p49
    %p51 = scmp.ne.s32.totalorder %s40, %s43
    %p52 = scmp.eq.s32.totalorder %s14, 7
    %p53 = por %p51, %p52
    %p54 = scmp.ne.s32.totalorder %s43, %s44
    %p55 = scmp.eq.s32.totalorder %s14, 0
    %p56 = por %p54, %p55
    %p57 = scmp.ne.s32.totalorder %s43, %s44
    %p58 = scmp.eq.s32.totalorder %s15, 7
    %p59 = por %p57, %p58
    %p61 = scmp.ne.s32.totalorder %s44, %s60
    %p62 = scmp.eq.s32.totalorder %s15, 0
    %p63 = por %p61, %p62
    %s64 = ssub.s32 %s16, %s35
    %s65 = ssub.s32 %s18, %s27
    %s66 = sor.u32 %s64, %s65
    %p67 = scmp.eq.s32.totalorder %s66, 0
    %s69 = sadd.s32 %s68, 1
    %s70 = scalar_select %p67, %s68, %s69
    %p73 = pneg %p67
    %p74 = scmp.eq.s32.totalorder %s9, 7
    %p75 = por %p73, %p74
    %p76 = scmp.ne.s32.totalorder %s68, %s71
    %p77 = scmp.eq.s32.totalorder %s9, 0
    %p78 = por %p76, %p77
    %p79 = scmp.ne.s32.totalorder %s68, %s71
    %p80 = scmp.eq.s32.totalorder %s14, 7
    %p81 = por %p79, %p80
    %p82 = scmp.ne.s32.totalorder %s71, %s72
    %p83 = scmp.eq.s32.totalorder %s14, 0
    %p84 = por %p82, %p83
    %p85 = scmp.ne.s32.totalorder %s71, %s72
    %p86 = scmp.eq.s32.totalorder %s15, 7
    %p87 = por %p85, %p86
    %p89 = scmp.ne.s32.totalorder %s72, %s88
    %p90 = scmp.eq.s32.totalorder %s15, 0
    %p91 = por %p89, %p90
    %s92 = ssub.s32 %s16, %s35
    %s93 = ssub.s32 %s18, %s27
    %s94 = sor.u32 %s92, %s93
    %p95 = scmp.eq.s32.totalorder %s94, 0
    %s97 = sadd.s32 %s96, 1
    %s98 = scalar_select %p95, %s96, %s97
    %p101 = pneg %p95
    %p102 = scmp.eq.s32.totalorder %s9, 7
    %p103 = por %p101, %p102
    %p104 = scmp.ne.s32.totalorder %s96, %s99
    %p105 = scmp.eq.s32.totalorder %s9, 0
    %p106 = por %p104, %p105
    %p107 = scmp.ne.s32.totalorder %s96, %s99
    %p108 = scmp.eq.s32.totalorder %s14, 7
    %p109 = por %p107, %p108
    %p110 = scmp.ne.s32.totalorder %s99, %s100
    %p111 = scmp.eq.s32.totalorder %s14, 0
    %p112 = por %p110, %p111
    %p113 = scmp.ne.s32.totalorder %s99, %s100
    %p114 = scmp.eq.s32.totalorder %s15, 7
    %p115 = por %p113, %p114
    %p117 = scmp.ne.s32.totalorder %s100, %s116
    %p118 = scmp.eq.s32.totalorder %s15, 0
    %p119 = por %p117, %p118
    %s120 = ssub.s32 %s16, %s35
    %s121 = ssub.s32 %s17, %s31
    %s122 = sor.u32 %s120, %s121
    %p123 = scmp.eq.s32.totalorder %s122, 0
    %s125 = sadd.s32 %s124, 1
    %s126 = scalar_select %p123, %s124, %s125
    %p129 = pneg %p123
    %p130 = scmp.eq.s32.totalorder %s9, 7
    %p131 = por %p129, %p130
    %p132 = scmp.ne.s32.totalorder %s124, %s127
    %p133 = scmp.eq.s32.totalorder %s9, 0
    %p134 = por %p132, %p133
    %p135 = scmp.ne.s32.totalorder %s124, %s127
    %p136 = scmp.eq.s32.totalorder %s14, 7
    %p137 = por %p135, %p136
    %p138 = scmp.ne.s32.totalorder %s127, %s128
    %p139 = scmp.eq.s32.totalorder %s14, 0
    %p140 = por %p138, %p139
    %p141 = scmp.ne.s32.totalorder %s127, %s128
    %p142 = scmp.eq.s32.totalorder %s15, 7
    %p143 = por %p141, %p142
    %p145 = scmp.ne.s32.totalorder %s128, %s144
    %p146 = scmp.eq.s32.totalorder %s15, 0
    %p147 = por %p145, %p146
    %p148 = scmp.le.s32.totalorder 1, %s9
    %p149 = scmp.lt.s32.totalorder %s9, 9
    %p150 = pnand %p148, %p149
    %p151 = pneg %p150
    // Predicated region
    $region9: #{multi_head_attention.8} parent=5 // pred_check
      _
    $region10: #{multi_head_attention.8} parent=5 // pred_check_branch
      %153 = sbr.rel (%p150) target = $region12
    $region11: #{multi_head_attention.8} parent=5 // pred_region
      %s154 = ssub.s32 %s9, 1
    $region12: #{multi_head_attention.8} parent=5 // pred_fallthru
      _
    %p155 = scmp.lt.s32.totalorder %s9, 8
    // Predicated region
    $region13: #{multi_head_attention.8} parent=5 // pred_check
      %p156 = pneg %p155
    $region14: #{multi_head_attention.8} parent=5 // pred_check_branch
      %158 = sbr.rel (%p156) target = $region16
    $region15: #{multi_head_attention.8} parent=5 // pred_region
      // Predicated region
      $region17: #{multi_head_attention.8} parent=15 // pred_check
        %p159 = pneg %p50
      $region18: #{multi_head_attention.8} parent=15 // pred_check_branch
        %161 = sbr.rel (%p159) target = $region20
      $region19: #{multi_head_attention.8} parent=15 // pred_region
        %p162 = scmp.lt.s32.totalorder %s16, 7
        %s163 = scalar_select %p162, %s16, 7
        %p164 = scmp.lt.s32.totalorder %s17, 0
        %s165 = scalar_select %p164, %s17, 0
        %s166 = sadd.s32 %s165, %s163
        %s167 = smul.addr %s166, 8
        %s168 = scalar_lea.vmem %s0, %s167
      $region20: #{multi_head_attention.8} parent=15 // pred_fallthru
        _
      // Predicated region
      $region21: #{multi_head_attention.8} parent=15 // pred_check
        %p169 = pneg %p78
      $region22: #{multi_head_attention.8} parent=15 // pred_check_branch
        %171 = sbr.rel (%p169) target = $region24
      $region23: #{multi_head_attention.8} parent=15 // pred_region
        %p172 = scmp.lt.s32.totalorder %s16, 7
        %s173 = scalar_select %p172, %s16, 7
        %p174 = scmp.lt.s32.totalorder %s18, 0
        %s175 = scalar_select %p174, %s18, 0
        %s176 = sadd.s32 %s175, %s173
        %s177 = smul.addr %s176, 8
        %s178 = scalar_lea.vmem %s1, %s177
      $region24: #{multi_head_attention.8} parent=15 // pred_fallthru
        _
      // Predicated region
      $region25: #{multi_head_attention.8} parent=15 // pred_check
        %p179 = pneg %p106
      $region26: #{multi_head_attention.8} parent=15 // pred_check_branch
        %181 = sbr.rel (%p179) target = $region28
      $region27: #{multi_head_attention.8} parent=15 // pred_region
        %p182 = scmp.lt.s32.totalorder %s16, 7
        %s183 = scalar_select %p182, %s16, 7
        %p184 = scmp.lt.s32.totalorder %s18, 0
        %s185 = scalar_select %p184, %s18, 0
        %s186 = sadd.s32 %s185, %s183
        %s187 = smul.addr %s186, 8
        %s188 = scalar_lea.vmem %s2, %s187
      $region28: #{multi_head_attention.8} parent=15 // pred_fallthru
        _
    $region16: #{multi_head_attention.8} parent=5 // pred_fallthru
      _
    %p189 = scmp.le.s32.totalorder 1, %s9
    %p190 = scmp.lt.s32.totalorder %s9, 9
    %p191 = pnand %p189, %p190
    %p192 = pneg %p191
    // Predicated region
    $region29: #{multi_head_attention.8} parent=5 // pred_check
      _
    $region30: #{multi_head_attention.8} parent=5 // pred_check_branch
      %194 = sbr.rel (%p191) target = $region32
    $region31: #{multi_head_attention.8} parent=5 // pred_region
      %s195 = ssub.s32 %s9, 1
      %p196 = scmp.lt.s32.totalorder %s19, 7
      %s197 = scalar_select %p196, %s19, 7
      %p198 = scmp.lt.s32.totalorder %s20, 0
      %s199 = scalar_select %p198, %s20, 0
      %s200 = sadd.s32 %s199, %s197
      %s201 = smul.addr %s200, 8
      %s202 = scalar_lea.vmem %s0, %s201
      %p203 = pneg %p56
      %p204 = pneg %p53
      %p205 = scmp.lt.s32.totalorder %s19, 7
      %s206 = scalar_select %p205, %s19, 7
      %p207 = scmp.lt.s32.totalorder %s21, 0
      %s208 = scalar_select %p207, %s21, 0
      %s209 = sadd.s32 %s208, %s206
      %s210 = smul.addr %s209, 8
      %s211 = scalar_lea.vmem %s1, %s210
      %p212 = pneg %p84
      %p213 = pneg %p81
      %p214 = scmp.lt.s32.totalorder %s19, 7
      %s215 = scalar_select %p214, %s19, 7
      %p216 = scmp.lt.s32.totalorder %s21, 0
      %s217 = scalar_select %p216, %s21, 0
      %s218 = sadd.s32 %s217, %s215
      %s219 = smul.addr %s218, 8
      %s220 = scalar_lea.vmem %s2, %s219
      %p221 = pneg %p112
      %p222 = pneg %p109
      %p223 = pneg %p140
      %p224 = pneg %p137
      %p225 = scmp.lt.s32.totalorder %s19, 7
      %s226 = scalar_select %p225, %s19, 7
      %p227 = scmp.lt.s32.totalorder %s20, 0
      %s228 = scalar_select %p227, %s20, 0
      %s229 = sadd.s32 %s228, %s226
      %s230 = smul.addr %s229, 8
      %s231 = scalar_lea.vmem %s3, %s230
      %p232 = scmp.lt.s32.totalorder %s19, 7
      %s233 = scalar_select %p232, %s19, 7
      %p234 = scmp.lt.s32.totalorder %s20, 0
      %s235 = scalar_select %p234, %s20, 0
      %s236 = sadd.s32 %s235, %s233
      %s237 = smul.addr %s236, 8
      %s238 = scalar_lea.vmem %s0, %s237
      %p239 = scmp.lt.s32.totalorder %s19, 7
      %s240 = scalar_select %p239, %s19, 7
      %p241 = scmp.lt.s32.totalorder %s21, 0
      %s242 = scalar_select %p241, %s21, 0
      %s243 = sadd.s32 %s242, %s240
      %s244 = smul.addr %s243, 8
      %s245 = scalar_lea.vmem %s1, %s244
      %p246 = scmp.lt.s32.totalorder %s19, 7
      %s247 = scalar_select %p246, %s19, 7
      %p248 = scmp.lt.s32.totalorder %s21, 0
      %s249 = scalar_select %p248, %s21, 0
      %s250 = sadd.s32 %s249, %s247
      %s251 = smul.addr %s250, 8
      %s252 = scalar_lea.vmem %s2, %s251
      %p253 = scmp.lt.s32.totalorder %s19, 7
      %s254 = scalar_select %p253, %s19, 7
      %p255 = scmp.lt.s32.totalorder %s20, 0
      %s256 = scalar_select %p255, %s20, 0
      %s257 = sadd.s32 %s256, %s254
      %s258 = smul.addr %s257, 8
      %s259 = scalar_lea.vmem %s3, %s258
      %p260 = scmp.eq.s32.totalorder %s21, 0
      // Predicated region
      $region33: #{multi_head_attention.8} parent=31 // pred_check
        %p261 = pneg %p260
      $region34: #{multi_head_attention.8} parent=31 // pred_check_branch
        %263 = sbr.rel (%p261) target = $region36
      $region35: #{multi_head_attention.8} parent=31 // pred_region
        %vm264 = vcmask 7168
        %265 = vst.msk [vmem:[#allocation2] sm:$0xff] %vm264, -inf
        %266 = vst.msk [vmem:[#allocation3] sm:$0xff] %vm264, 0.0
        %vm267 = vcmask 64512
        %268 = vst.msk [vmem:[#allocation4] sm:$0xff] %vm267, 0.0
      $region36: #{multi_head_attention.8} parent=31 // pred_fallthru
        _
      %v269 = vld [vmem:[%s238] sm:$0xff]
      %v270 = vld [vmem:[%s245] sm:$0xff]
      %v271 = vld [vmem:[%s252] sm:$0xff]
      %vm272 = vcmask 64512
      %v274 = vsel %vm272, %v269, 0
      %v277 = vsel %vm272, %v270, 0
      %279 = vmatprep.subr.mxu0 0.0
      %280 = vmatpush1.xpose.msra.mxu0 0.0
      %281 = vmatprep.subr.mxu0 0.0
      %282 = vmatpush1.xpose.msra.mxu0 0.0
      %283 = vmatprep.subr.mxu0 0.0
      %284 = vmatpush1.xpose.msra.mxu0 0.0
      %285 = vmatprep.subr.mxu0 0.0
      %286 = vmatpush1.xpose.msra.mxu0 0.0
      %287 = vmatprep.subr.mxu0 0.0
      %288 = vmatpush1.xpose.msra.mxu0 0.0
      %289 = vmatprep.subr.mxu0 0.0
      %290 = vmatpush1.xpose.msra.mxu0 0.0
      %291 = vmatprep.subr.mxu0 0.0
      %292 = vmatpush1.xpose.msra.mxu0 0.0
      %293 = vmatprep.subr.mxu0 0.0
      %294 = vmatpush1.xpose.msra.mxu0 0.0
      %295 = vmatprep.subr.mxu0 0.0
      %296 = vmatpush1.xpose.msra.mxu0 0.0
      %297 = vmatprep.subr.mxu0 0.0
      %298 = vmatpush1.xpose.msra.mxu0 0.0
      %299 = vmatprep.subr.mxu0 0.0
      %300 = vmatpush1.xpose.msra.mxu0 0.0
      %301 = vmatprep.subr.mxu0 0.0
      %302 = vmatpush1.xpose.msra.mxu0 0.0
      %303 = vmatprep.subr.mxu0 0.0
      %304 = vmatpush1.xpose.msra.mxu0 0.0
      %305 = vmatprep.subr.mxu0 0.0
      %306 = vmatpush1.xpose.msra.mxu0 0.0
      %307 = vmatprep.subr.mxu0 0.0
      %308 = vmatpush1.xpose.msra.mxu0 0.0
      %309 = vmatprep.subr.mxu0 0.0
      %310 = vmatpush1.xpose.msra.mxu0 %v277
      %311 = vmatprep.subr.mxu0 0.0
      %312 = vmatpush2.xpose.msra.mxu0 0.0
      %313 = vmatprep.subr.mxu0 0.0
      %314 = vmatpush2.xpose.msra.mxu0 0.0
      %315 = vmatprep.subr.mxu0 0.0
      %316 = vmatpush2.xpose.msra.mxu0 0.0
      %317 = vmatprep.subr.mxu0 0.0
      %318 = vmatpush2.xpose.msra.mxu0 0.0
      %319 = vmatprep.subr.mxu0 0.0
      %320 = vmatpush2.xpose.msra.mxu0 0.0
      %321 = vmatprep.subr.mxu0 0.0
      %322 = vmatpush2.xpose.msra.mxu0 0.0
      %323 = vmatprep.subr.mxu0 0.0
      %324 = vmatpush2.xpose.msra.mxu0 0.0
      %325 = vmatprep.subr.mxu0 0.0
      %326 = vmatpush2.xpose.msra.mxu0 0.0
      %327 = vmatprep.subr.mxu0 0.0
      %328 = vmatpush2.xpose.msra.mxu0 0.0
      %329 = vmatprep.subr.mxu0 0.0
      %330 = vmatpush2.xpose.msra.mxu0 0.0
      %331 = vmatprep.subr.mxu0 0.0
      %332 = vmatpush2.xpose.msra.mxu0 0.0
      %333 = vmatprep.subr.mxu0 0.0
      %334 = vmatpush2.xpose.msra.mxu0 0.0
      %335 = vmatprep.subr.mxu0 0.0
      %336 = vmatpush2.xpose.msra.mxu0 0.0
      %337 = vmatprep.subr.mxu0 0.0
      %338 = vmatpush2.xpose.msra.mxu0 0.0
      %339 = vmatprep.subr.mxu0 0.0
      %340 = vmatpush2.xpose.msra.mxu0 0.0
      %341 = vmatprep.subr.mxu0 0.0
      %342 = vmatpush2.xpose.msra.mxu0 0.0
      %343 = vmatprep.mubr.f32.mxu0 0.0
      %344 = vmatmul.mubr.f32.gmra.mxu0 %v274
      %v345 = vpop.f32.mrf.mxu0
      %v346 = vadd.f32 0.0, %v345
      %v347 = vpop.f32.mrf.mxu0
      %348 = vdwg.mxu0
      %v349 = vmul.f32 %v346, 0.35355338
      %v350 = vld [vmem:[#allocation2] sm:$0xff]
      %v351 = vsel %vm272, %v349, -inf
      %352 = vmax.xlane.f32.xlu0 %v351
      %v353 = vpop.xlane.xlu0 %352
      %v354 = vmax.f32 %v350, %v353
      %v355 = vsub.f32 %v350, %v354
      %v356 = vmul.f32 %v355, 1.442695
      %v357 = vpow.pop %v356
      %359 = vset.pattern.permute.xlu0 0
      %360 = vperm.xlu0 %359, %v354
      %v361 = vpop.permute.xlu0 %360
      %v363 = vsub.f32 %v349, %v361
      %v364 = vmul.f32 %v363, 1.442695
      %v365 = vpow.pop %v364
      %v366 = vld [vmem:[#allocation3] sm:$0xff]
      %v367 = vmul.f32 %v357, %v366
      %v368 = vsel %vm272, %v365, 0.0
      %369 = vadd.xlane.f32.xlu0 %v368
      %v370 = vpop.xlane.xlu0 %369
      %v371 = vadd.f32 %v367, %v370
      %vm372 = vcmask 7168
      %373 = vst.msk [vmem:[#allocation3] sm:$0xff] %vm372, %v371
      %v374 = vld [vmem:[#allocation4] sm:$0xff]
      %376 = vset.pattern.permute.xlu0 0
      %377 = vperm.xlu0 %376, %v357
      %v378 = vpop.permute.xlu0 %377
      %v380 = vmul.f32 %v378, %v374
      %v382 = vsel %vm272, %v365, 0
      %384 = vmatprep.subr.mxu0 0.0
      %385 = vmatpush1.msra.mxu0 0.0
      %386 = vmatprep.subr.mxu0 0.0
      %387 = vmatpush1.msra.mxu0 0.0
      %388 = vmatprep.subr.mxu0 0.0
      %389 = vmatpush1.msra.mxu0 0.0
      %390 = vmatprep.subr.mxu0 0.0
      %391 = vmatpush1.msra.mxu0 0.0
      %392 = vmatprep.subr.mxu0 0.0
      %393 = vmatpush1.msra.mxu0 0.0
      %394 = vmatprep.subr.mxu0 0.0
      %395 = vmatpush1.msra.mxu0 0.0
      %396 = vmatprep.subr.mxu0 0.0
      %397 = vmatpush1.msra.mxu0 0.0
      %398 = vmatprep.subr.mxu0 0.0
      %399 = vmatpush1.msra.mxu0 0.0
      %400 = vmatprep.subr.mxu0 0.0
      %401 = vmatpush1.msra.mxu0 0.0
      %402 = vmatprep.subr.mxu0 0.0
      %403 = vmatpush1.msra.mxu0 0.0
      %404 = vmatprep.subr.mxu0 0.0
      %405 = vmatpush1.msra.mxu0 0.0
      %406 = vmatprep.subr.mxu0 0.0
      %407 = vmatpush1.msra.mxu0 0.0
      %408 = vmatprep.subr.mxu0 0.0
      %409 = vmatpush1.msra.mxu0 0.0
      %410 = vmatprep.subr.mxu0 0.0
      %411 = vmatpush1.msra.mxu0 0.0
      %412 = vmatprep.subr.mxu0 0.0
      %413 = vmatpush1.msra.mxu0 0.0
      %414 = vmatprep.subr.mxu0 0.0
      %415 = vmatpush1.msra.mxu0 %v271
      %416 = vmatprep.subr.mxu0 0.0
      %417 = vmatpush2.msra.mxu0 0.0
      %418 = vmatprep.subr.mxu0 0.0
      %419 = vmatpush2.msra.mxu0 0.0
      %420 = vmatprep.subr.mxu0 0.0
      %421 = vmatpush2.msra.mxu0 0.0
      %422 = vmatprep.subr.mxu0 0.0
      %423 = vmatpush2.msra.mxu0 0.0
      %424 = vmatprep.subr.mxu0 0.0
      %425 = vmatpush2.msra.mxu0 0.0
      %426 = vmatprep.subr.mxu0 0.0
      %427 = vmatpush2.msra.mxu0 0.0
      %428 = vmatprep.subr.mxu0 0.0
      %429 = vmatpush2.msra.mxu0 0.0
      %430 = vmatprep.subr.mxu0 0.0
      %431 = vmatpush2.msra.mxu0 0.0
      %432 = vmatprep.subr.mxu0 0.0
      %433 = vmatpush2.msra.mxu0 0.0
      %434 = vmatprep.subr.mxu0 0.0
      %435 = vmatpush2.msra.mxu0 0.0
      %436 = vmatprep.subr.mxu0 0.0
      %437 = vmatpush2.msra.mxu0 0.0
      %438 = vmatprep.subr.mxu0 0.0
      %439 = vmatpush2.msra.mxu0 0.0
      %440 = vmatprep.subr.mxu0 0.0
      %441 = vmatpush2.msra.mxu0 0.0
      %442 = vmatprep.subr.mxu0 0.0
      %443 = vmatpush2.msra.mxu0 0.0
      %444 = vmatprep.subr.mxu0 0.0
      %445 = vmatpush2.msra.mxu0 0.0
      %446 = vmatprep.subr.mxu0 0.0
      %447 = vmatpush2.msra.mxu0 0.0
      %448 = vmatprep.mubr.f32.mxu0 0.0
      %449 = vmatmul.mubr.f32.gmra.mxu0 %v382
      %v450 = vpop.f32.mrf.mxu0
      %v451 = vadd.f32 0.0, %v450
      %v452 = vpop.f32.mrf.mxu0
      %453 = vdwg.mxu0
      %v454 = vadd.f32 %v380, %v451
      %455 = vst.msk [vmem:[#allocation4] sm:$0xff] %vm272, %v454
      %456 = vst.msk [vmem:[#allocation2] sm:$0xff] %vm372, %v354
      // Predicated region
      $region37: #{multi_head_attention.8} parent=31 // pred_check
        %p457 = pneg %p260
      $region38: #{multi_head_attention.8} parent=31 // pred_check_branch
        %459 = sbr.rel (%p457) target = $region40
      $region39: #{multi_head_attention.8} parent=31 // pred_region
        %v460 = vld [vmem:[#allocation4] sm:$0xff]
        %v461 = vld [vmem:[#allocation3] sm:$0xff]
        %463 = vset.pattern.permute.xlu0 0
        %464 = vperm.xlu0 %463, %v461
        %v465 = vpop.permute.xlu0 %464
        %v467 = vrcp.pop %v465
        %v468 = vmul.f32 %v460, %v467
        %469 = vst.msk [vmem:[%s259] sm:$0xff] %vm272, %v468
      $region40: #{multi_head_attention.8} parent=31 // pred_fallthru
        _
      %p470 = scmp.lt.s32.totalorder %s19, 7
      %s471 = scalar_select %p470, %s19, 7
      %p472 = scmp.lt.s32.totalorder %s20, 0
      %s473 = scalar_select %p472, %s20, 0
      %s474 = sadd.s32 %s473, %s471
      %s475 = smul.addr %s474, 8
      %s476 = scalar_lea.vmem %s3, %s475
      // Predicated region
      $region41: #{multi_head_attention.8} parent=31 // pred_check
        %p477 = pneg %p137
      $region42: #{multi_head_attention.8} parent=31 // pred_check_branch
        %479 = sbr.rel (%p477) target = $region44
      $region43: #{multi_head_attention.8} parent=31 // pred_region
        _
      $region44: #{multi_head_attention.8} parent=31 // pred_fallthru
        _
    $region32: #{multi_head_attention.8} parent=5 // pred_fallthru
      _
    %p480 = scmp.le.s32.totalorder 2, %s9
    // Predicated region
    $region45: #{multi_head_attention.8} parent=5 // pred_check
      %p481 = pneg %p480
    $region46: #{multi_head_attention.8} parent=5 // pred_check_branch
      %483 = sbr.rel (%p481) target = $region48
    $region47: #{multi_head_attention.8} parent=5 // pred_region
      %s484 = ssub.s32 %s9, 2
      // Predicated region
      $region49: #{multi_head_attention.8} parent=47 // pred_check
        %p485 = pneg %p143
      $region50: #{multi_head_attention.8} parent=47 // pred_check_branch
        %487 = sbr.rel (%p485) target = $region52
      $region51: #{multi_head_attention.8} parent=47 // pred_region
        %p488 = scmp.lt.s32.totalorder %s22, 7
        %s489 = scalar_select %p488, %s22, 7
        %p490 = scmp.lt.s32.totalorder %s23, 0
        %s491 = scalar_select %p490, %s23, 0
        %s492 = sadd.s32 %s491, %s489
        %s493 = smul.addr %s492, 8
        %s494 = scalar_lea.vmem %s3, %s493
      $region52: #{multi_head_attention.8} parent=47 // pred_fallthru
        _
    $region48: #{multi_head_attention.8} parent=5 // pred_fallthru
      _
  $region6: #{multi_head_attention.8} parent=0 // loop_footer
    %s13 = sadd.s32 1, %s9
  $region7: #{multi_head_attention.8} parent=0 // loop_footer_branch
    %8 = sbr.rel target = $region3
  $region8: #{multi_head_attention.8} parent=0 // loop_exit
    _

</llo_original>
